<compile_context>
chip_gen: v6e
topology: v6e:2x2x1
jax: 0.10.0
libtpu: 0.0.40
codegen_flags: <defaults>
</compile_context>

<pallas_src>
import functools
import math

import numpy as np
import jax
import jax.numpy as jnp
from jax.experimental import pallas as pl
from jax.experimental.pallas import tpu as pltpu

# ----------------------------- model config ---------------------------------
DIM = 128
N_LAYERS = 2
N_HEADS = 4
N_KV = 4                      # n_kv_heads is None in ModelArgs -> == n_heads
HEAD_DIM = DIM // N_HEADS     # 32 (even, required for RoPE)
KVD = N_KV * HEAD_DIM         # 128
VOCAB = 256
MAX_SEQ = 16
MULTIPLE_OF = 256
_hid = int(2 * (4 * DIM) / 3)
HID = MULTIPLE_OF * ((_hid + MULTIPLE_OF - 1) // MULTIPLE_OF)   # 512
EPS = 1e-5
B = 2
START_POS = 3

WBIG_COLS = 2 * DIM + 2 * KVD + 2 * HID    # 1536: wq|wk|wv|wo|w1|w3
DYN_ROWS = B + 2                           # h0 rows, cos, sin
STAT_ROWS = N_HEADS + 1                    # sel_v rows, final norm weight

assert N_KV == N_HEADS and KVD == DIM


# ----------------------------- Pallas kernel ---------------------------------
def _decoder_kernel(
    sp_ref,                                              # SMEM (1,) int32 (scalar prefetch)
    dyn_ref, stat_ref, selqk_ref,                        # const blocks
    norms_ref, wbig_ref, w2_ref, ckv_ref,                # per-layer blocks
    wout_ref,                                            # const vocab projection
    logits_ref, newkv_ref,                               # outputs
    h_scr,                                               # VMEM scratch (B, D) f32
    *, batch, dim, n_heads, head_dim, kvd, hid, s_max, eps):
  f32 = jnp.float32
  bf16 = jnp.bfloat16
  layer = pl.program_id(0)
  start_pos = sp_ref[0]

  @pl.when(layer == 0)
  def _():
    h_scr[...] = dyn_ref[:batch, :]                      # embedded tokens

  h = h_scr[...]                                         # (B, D) f32
  cosv = dyn_ref[batch:batch + 1, :]                     # (1, D) f32
  sinv = dyn_ref[batch + 1:batch + 2, :]                 # (1, D) f32 (sign-folded)
  sel_v = stat_ref[:n_heads, :]                          # (H, KVD) f32
  norm_w = stat_ref[n_heads:n_heads + 1, :]              # (1, D) f32
  sel_qk = selqk_ref[...]                                # (KVD, H) f32
  anorm = norms_ref[0:1, :]                              # (1, D) f32
  fnorm = norms_ref[1:2, :]

  # ---- RMSNorm (attention) + fused Q|K|V projection (bf16 MXU, f32 acc) ----
  xn = (h * jax.lax.rsqrt(jnp.mean(h * h, axis=-1, keepdims=True) + eps)) * anorm
  qkv = jnp.dot(xn.astype(bf16), wbig_ref[:, :dim + 2 * kvd],
                preferred_element_type=f32)              # (B, D+2*KVD)
  q = qkv[:, :dim]
  k = qkv[:, dim:dim + kvd]
  v = qkv[:, dim + kvd:]

  # ---- RoPE (global rotate-half column layout; sin is sign-folded) ----
  q = q * cosv + pltpu.roll(q, shift=dim // 2, axis=1) * sinv
  k = k * cosv + pltpu.roll(k, shift=kvd // 2, axis=1) * sinv

  # ---- new KV row: one lane-dense (B, 2*KVD) store per layer ----
  newkv_ref[...] = jnp.concatenate([k, v], axis=1).astype(bf16)

  # ---- attention over cache + current token (vectorized over batch & heads) ----
  scale = 1.0 / math.sqrt(head_dim)
  t_ids = jax.lax.broadcasted_iota(jnp.int32, (s_max, 1), 0)
  is_new = (t_ids == start_pos)[None, :, :]              # (1, S, 1)
  valid = (t_ids <= start_pos)[None, :, :]               # (1, S, 1)

  ck = ckv_ref[:, :, :kvd].astype(f32)                   # (B, S, KVD)
  cv = ckv_ref[:, :, kvd:].astype(f32)
  kk = jnp.where(is_new, k[:, None, :], ck)              # (B, S, KVD)
  vv = jnp.where(is_new, v[:, None, :], cv)
  prod = kk * q[:, None, :]                              # (B, S, KVD)

  s_bh = (jnp.dot(prod.reshape(batch * s_max, kvd), sel_qk,
                  preferred_element_type=f32) * scale).reshape(batch, s_max, n_heads)
  s_bh = jnp.where(valid, s_bh, -1e30)                   # (B, S, H)
  m = jnp.max(s_bh, axis=1, keepdims=True)               # (B, 1, H)
  e = jnp.exp(s_bh - m)
  p = e * pl.reciprocal(jnp.sum(e, axis=1, keepdims=True), approx=True)
  pexp = jnp.dot(p.reshape(batch * s_max, n_heads), sel_v,
                 preferred_element_type=f32).reshape(batch, s_max, kvd)
  attn = jnp.sum(pexp * vv, axis=1)                      # (B, KVD) == (B, D) for n_rep == 1

  h1 = h + jnp.dot(attn.astype(bf16),
                   wbig_ref[:, dim + 2 * kvd:2 * dim + 2 * kvd],     # wo
                   preferred_element_type=f32)

  # ---- RMSNorm (FFN) + SwiGLU with fused w1|w3 ----
  xn2 = (h1 * jax.lax.rsqrt(jnp.mean(h1 * h1, axis=-1, keepdims=True) + eps)) * fnorm
  x13 = jnp.dot(xn2.astype(bf16), wbig_ref[:, 2 * dim + 2 * kvd:],   # w1|w3
                preferred_element_type=f32)              # (B, 2*HID)
  g = x13[:, :hid]
  up = x13[:, hid:]
  swish = g * pl.reciprocal(1.0 + jnp.exp(-g), approx=True)          # SiLU via EUP
  h2 = h1 + jnp.dot((swish * up).astype(bf16), w2_ref[...], preferred_element_type=f32)
  h_scr[...] = h2

  # ---- fused final RMSNorm + vocab projection at the last layer ----
  @pl.when(layer == pl.num_programs(0) - 1)
  def _():
    hn = (h2 * jax.lax.rsqrt(jnp.mean(h2 * h2, axis=-1, keepdims=True) + eps)) * norm_w
    logits_ref[...] = jnp.dot(hn.astype(bf16), wout_ref[...], preferred_element_type=f32)


# ----------------------------- pallas_call wrapper ----------------------------
def _const_spec(shape):
  zeros = (0,) * len(shape)
  return pl.BlockSpec(shape, lambda l, sp, _z=zeros: _z)


def _layer_spec(shape):
  ntrail = len(shape) - 1
  return pl.BlockSpec(shape, lambda l, sp, _n=ntrail: (l,) + (0,) * _n)


def make_fused_call():
  kernel = functools.partial(
      _decoder_kernel, batch=B, dim=DIM, n_heads=N_HEADS, head_dim=HEAD_DIM,
      kvd=KVD, hid=HID, s_max=MAX_SEQ, eps=EPS)
  in_specs = [
      _const_spec((DYN_ROWS, DIM)),                 # h0 rows | cos | sin      f32
      _const_spec((STAT_ROWS, DIM)),                # sel_v rows | final norm  f32
      _const_spec((KVD, N_HEADS)),                  # sel_qk                   f32
      _layer_spec((None, 2, DIM)),                  # attn norm | ffn norm     f32
      _layer_spec((None, DIM, WBIG_COLS)),          # wq|wk|wv|wo|w1|w3        bf16
      _layer_spec((None, HID, DIM)),                # w2                       bf16
      _layer_spec((None, B, MAX_SEQ, 2 * KVD)),     # cache K|V                bf16
      _const_spec((DIM, VOCAB)),                    # output projection        bf16
  ]
  out_specs = [
      _const_spec((B, VOCAB)),                      # logits                   f32
      _layer_spec((None, B, 2 * KVD)),              # new K|V rows             bf16
  ]
  out_shape = (
      jax.ShapeDtypeStruct((B, VOCAB), jnp.float32),
      jax.ShapeDtypeStruct((N_LAYERS, B, 2 * KVD), jnp.bfloat16),
  )
  grid_spec = pltpu.PrefetchScalarGridSpec(
      num_scalar_prefetch=1, grid=(N_LAYERS,),
      in_specs=in_specs, out_specs=out_specs,
      scratch_shapes=[pltpu.VMEM((B, DIM), jnp.float32)])
  return pl.pallas_call(
      kernel, grid_spec=grid_spec, out_shape=out_shape,
      compiler_params=pltpu.CompilerParams(
          dimension_semantics=("arbitrary",),
          vmem_limit_bytes=8 * 1024 * 1024))


_FUSED_CALL = make_fused_call()


# ----------------------------- RoPE layout helpers ----------------------------
def _rope_perm(dim, head_dim):
  """Column permutation -> global rotate-half layout.

  Permuted position p holds original column h*head_dim + 2*j + part with
  part = p // (dim/2), h = (p % (dim/2)) // (head_dim/2), j = p % (head_dim/2),
  so the in-kernel rotation is q*cos + roll(q, dim/2)*sign*sin.
  """
  p = np.arange(dim)
  part = p // (dim // 2)
  r = p % (dim // 2)
  h = r // (head_dim // 2)
  j = r % (head_dim // 2)
  return (h * head_dim + 2 * j + part).astype(np.int32)


# ----------------------------- parameters -------------------------------------
def init_params(key):
  def wmat(k, shape, fan_in):
    return (jax.random.normal(k, shape, jnp.float32) / np.sqrt(fan_in)).astype(jnp.bfloat16)

  key, ke, ko = jax.random.split(key, 3)
  params = {
      'tok_emb': jax.random.normal(ke, (VOCAB, DIM), jnp.float32),
      'norm_w': jnp.ones((DIM,), jnp.float32),
      'wout': wmat(ko, (DIM, VOCAB), DIM),
      'layers': [],
  }
  for _ in range(N_LAYERS):
    key, k1, k2, k3, k4, k5, k6, k7 = jax.random.split(key, 8)
    params['layers'].append(dict(
        wq=wmat(k1, (DIM, N_HEADS * HEAD_DIM), DIM),
        wk=wmat(k2, (DIM, KVD), DIM),
        wv=wmat(k3, (DIM, KVD), DIM),
        wo=wmat(k4, (DIM, DIM), DIM),
        w1=wmat(k5, (DIM, HID), DIM),
        w3=wmat(k6, (DIM, HID), DIM),
        w2=wmat(k7, (HID, DIM), HID),
        attn_norm=jnp.ones((DIM,), jnp.float32),
        ffn_norm=jnp.ones((DIM,), jnp.float32)))
  return params


def pack_params(params):
  """Stack per-layer weights along a leading layer axis, fuse wq|wk|wv|wo|w1|w3
  into one (L, D, 1536) bf16 block (rotate-half column permutation applied to
  wq / wk), merge the two RMSNorm vectors into (L, 2, D), and build the static
  const block (head-selector rows + final norm weight)."""
  perm = jnp.asarray(_rope_perm(DIM, HEAD_DIM))
  wbig, w2, norms = [], [], []
  for lp in params['layers']:
    wbig.append(jnp.concatenate(
        [lp['wq'][:, perm], lp['wk'][:, perm], lp['wv'],
         lp['wo'], lp['w1'], lp['w3']], axis=1))
    w2.append(lp['w2'])
    norms.append(jnp.stack([lp['attn_norm'], lp['ffn_norm']], axis=0))

  # Static selector constants (hoisted out of the per-layer kernel body).
  h_v = np.arange(N_HEADS)[:, None]
  d_v = np.arange(KVD)[None, :]
  sel_v = (d_v // HEAD_DIM == h_v).astype(np.float32)                    # (H, KVD)
  d_q = np.arange(KVD)[:, None]
  h_q = np.arange(N_HEADS)[None, :]
  sel_qk = ((d_q % (KVD // 2)) // (HEAD_DIM // 2) == h_q).astype(np.float32)  # (KVD, H)

  stat = jnp.concatenate([jnp.asarray(sel_v), params['norm_w'][None, :]], axis=0)
  return dict(
      tok_emb=params['tok_emb'],
      norms=jnp.stack(norms), wbig=jnp.stack(wbig), w2=jnp.stack(w2),
      stat=stat, sel_qk=jnp.asarray(sel_qk), wout=params['wout'])


# ----------------------------- decode step ------------------------------------
@functools.partial(jax.jit, donate_argnums=(3,))
def decode_step(packed, tokens, start_pos, cache_kv):
  # TODO(synk): nn.Embedding lookup stays as a jnp.take gather in JAX glue
  # (data-dependent row gather is not expressed with a simple BlockSpec here).
  h = jnp.take(packed['tok_emb'], tokens[:, 0], axis=0)            # (B, D) f32

  # RoPE cos / sign-folded sin from the *traced* start_pos (rotate-half layout),
  # packed with the embedded tokens into one dynamic const block.
  j = jnp.arange(HEAD_DIM // 2, dtype=jnp.float32)
  inv_freq = 1.0 / (10000.0 ** (2.0 * j / HEAD_DIM))
  ang = start_pos.astype(jnp.float32) * inv_freq
  cos_g = jnp.tile(jnp.cos(ang), 2 * N_HEADS)[None, :]             # (1, D)
  sin_half = jnp.tile(jnp.sin(ang), N_HEADS)
  sin_g = jnp.concatenate([-sin_half, sin_half])[None, :]          # (1, D)
  dyn = jnp.concatenate([h, cos_g, sin_g], axis=0)                 # (B+2, D) f32

  sp = jnp.reshape(start_pos, (1,)).astype(jnp.int32)
  logits, new_kv = _FUSED_CALL(
      sp, dyn, packed['stat'], packed['sel_qk'],
      packed['norms'], packed['wbig'], packed['w2'],
      cache_kv, packed['wout'])

  # O(1 row) in-place cache update on the donated buffer (K and V in one DUS).
  cache_kv = jax.lax.dynamic_update_slice_in_dim(
      cache_kv, new_kv[:, :, None, :], start_pos, axis=2)
  return logits[:, None, :], cache_kv


# ----------------------------- numpy reference --------------------------------
def _f64(x):
  return np.asarray(jax.device_get(jnp.asarray(x, jnp.float32)), dtype=np.float64)


def reference_forward(params, tokens_np, start_pos, ck_nat, cv_nat, perm):
  f = np.float64
  h = _f64(params['tok_emb'])[tokens_np[:, 0]]
  inv = 1.0 / (10000.0 ** (np.arange(0, HEAD_DIM, 2, dtype=f) / HEAD_DIM))
  ang = float(start_pos) * inv
  cos, sin = np.cos(ang), np.sin(ang)

  def rmsnorm(x, w):
    return _f64(w) * (x / np.sqrt(np.mean(x * x, -1, keepdims=True) + EPS))

  def rope(x):                                   # (B, H, hd), interleaved pairs
    x0, x1 = x[..., 0::2], x[..., 1::2]
    out = np.stack([x0 * cos - x1 * sin, x0 * sin + x1 * cos], axis=-1)
    return out.reshape(x.shape)

  bsz = tokens_np.shape[0]
  exp_k_rows, exp_v_rows = [], []
  for l, lp in enumerate(params['layers']):
    xn = rmsnorm(h, lp['attn_norm'])
    q = rope((xn @ _f64(lp['wq'])).reshape(bsz, N_HEADS, HEAD_DIM))
    k = rope((xn @ _f64(lp['wk'])).reshape(bsz, N_KV, HEAD_DIM))
    v = (xn @ _f64(lp['wv'])).reshape(bsz, N_KV, HEAD_DIM)
    keys = ck_nat[l].reshape(bsz, MAX_SEQ, N_KV, HEAD_DIM).copy()
    vals = cv_nat[l].reshape(bsz, MAX_SEQ, N_KV, HEAD_DIM).copy()
    keys[:, start_pos] = k
    vals[:, start_pos] = v
    keys = keys[:, :start_pos + 1]
    vals = vals[:, :start_pos + 1]
    s = np.einsum('bhd,bthd->bht', q, keys) / math.sqrt(HEAD_DIM)
    s = s - s.max(-1, keepdims=True)
    e = np.exp(s)
    pa = e / e.sum(-1, keepdims=True)
    o = np.einsum('bht,bthd->bhd', pa, vals).reshape(bsz, DIM)
    h = h + o @ _f64(lp['wo'])
    xn2 = rmsnorm(h, lp['ffn_norm'])
    g = xn2 @ _f64(lp['w1'])
    ff = ((g / (1 + np.exp(-g))) * (xn2 @ _f64(lp['w3']))) @ _f64(lp['w2'])
    h = h + ff
    exp_k_rows.append(k.reshape(bsz, KVD)[:, perm])     # expected row, kernel layout
    exp_v_rows.append(v.reshape(bsz, KVD))
  hn = rmsnorm(h, params['norm_w'])
  logits = (hn @ _f64(params['wout'])).reshape(bsz, 1, VOCAB)
  return logits, np.stack(exp_k_rows), np.stack(exp_v_rows)


# ----------------------------- main --------------------------------------------
if __name__ == "__main__":
  key = jax.random.PRNGKey(0)
  key, kp, kt, kc = jax.random.split(key, 4)
  params = init_params(kp)
  packed = pack_params(params)
  tokens = jax.random.randint(kt, (B, 1), 0, VOCAB, dtype=jnp.int32)

  # Prior KV-cache state (rows < START_POS are "already decoded" context).
  # K (columns 0:KVD) is stored in the kernel's rotate-half layout, V (KVD:) natural.
  cache_kv0 = (0.5 * jax.random.normal(
      kc, (N_LAYERS, B, MAX_SEQ, 2 * KVD), jnp.float32)).astype(jnp.bfloat16)

  perm = _rope_perm(DIM, HEAD_DIM)
  ckv0_np = _f64(cache_kv0)                    # host copy (before donation)
  ck0_nat = np.empty((N_LAYERS, B, MAX_SEQ, KVD))
  ck0_nat[..., perm] = ckv0_np[..., :KVD]      # kernel layout -> natural layout
  cv0_np = ckv0_np[..., KVD:]

  logits, cache_kv1 = decode_step(packed, tokens, jnp.int32(START_POS), cache_kv0)
  logits = jax.block_until_ready(logits)

  tokens_np = np.asarray(jax.device_get(tokens))
  ref_logits, ref_krows, ref_vrows = reference_forward(
      params, tokens_np, START_POS, ck0_nat, cv0_np, perm)

  np.testing.assert_allclose(np.asarray(logits, np.float64), ref_logits,
                             rtol=5e-2, atol=1e-1)

  ckv1 = _f64(cache_kv1)
  other = np.arange(MAX_SEQ) != START_POS
  np.testing.assert_array_equal(ckv1[:, :, other, :], ckv0_np[:, :, other, :])
  np.testing.assert_allclose(ckv1[:, :, START_POS, :KVD], ref_krows, rtol=5e-2, atol=5e-2)
  np.testing.assert_allclose(ckv1[:, :, START_POS, KVD:], ref_vrows, rtol=5e-2, atol=5e-2)

  print("KERNEL_OK")
</pallas_src>

<mosaic_0001>
module attributes {stable_mosaic.version = 11 : i64} {
  func.func @_decoder_kernel(%arg0: i32, %arg1: memref<1xi32, #tpu.memory_space<smem>>, %arg2: memref<4x128xf32, #tpu.memory_space<vmem>>, %arg3: memref<5x128xf32, #tpu.memory_space<vmem>>, %arg4: memref<128x4xf32, #tpu.memory_space<vmem>>, %arg5: memref<1x2x128xf32, #tpu.memory_space<vmem>>, %arg6: memref<1x128x1536xbf16, #tpu.memory_space<vmem>>, %arg7: memref<1x512x128xbf16, #tpu.memory_space<vmem>>, %arg8: memref<1x2x16x256xbf16, #tpu.memory_space<vmem>>, %arg9: memref<128x256xbf16, #tpu.memory_space<vmem>>, %arg10: memref<2x256xf32, #tpu.memory_space<vmem>>, %arg11: memref<1x2x256xbf16, #tpu.memory_space<vmem>>, %arg12: memref<2x128xf32, #tpu.memory_space<vmem>>) attributes {dimension_semantics = [#tpu.dimension_semantics<arbitrary>], iteration_bounds = array<i64: 2>, scalar_prefetch = 1 : i64, scratch_operands = 1 : i64, tpu.core_type = #tpu.core_type<tc>, window_params = [{pipeline_mode = #tpu.pipeline_mode<synchronous>, transform_indices = @transform_0, window_bounds = array<i64: 4, 128>}, {pipeline_mode = #tpu.pipeline_mode<synchronous>, transform_indices = @transform_1, window_bounds = array<i64: 5, 128>}, {pipeline_mode = #tpu.pipeline_mode<synchronous>, transform_indices = @transform_2, window_bounds = array<i64: 128, 4>}, {transform_indices = @transform_3, window_bounds = array<i64: 1, 2, 128>}, {transform_indices = @transform_4, window_bounds = array<i64: 1, 128, 1536>}, {transform_indices = @transform_5, window_bounds = array<i64: 1, 512, 128>}, {transform_indices = @transform_6, window_bounds = array<i64: 1, 2, 16, 256>}, {pipeline_mode = #tpu.pipeline_mode<synchronous>, transform_indices = @transform_7, window_bounds = array<i64: 128, 256>}, {pipeline_mode = #tpu.pipeline_mode<synchronous>, transform_indices = @transform_8, window_bounds = array<i64: 2, 256>}, {transform_indices = @transform_9, window_bounds = array<i64: 1, 2, 256>}]} {
    %c0 = arith.constant 0 : index
    %0 = memref.load %arg1[%c0] : memref<1xi32, #tpu.memory_space<smem>>
    %c0_i32 = arith.constant 0 : i32
    %1 = arith.cmpi eq, %arg0, %c0_i32 : i32
    %2 = arith.extui %1 : i1 to i32
    %c0_i32_0 = arith.constant 0 : i32
    %3 = arith.cmpi ne, %2, %c0_i32_0 : i32
    scf.if %3 {
      %c0_57 = arith.constant 0 : index
      %c0_58 = arith.constant 0 : index
      %142 = vector.load %arg2[%c0_57, %c0_58] : memref<4x128xf32, #tpu.memory_space<vmem>>, vector<2x128xf32>
      %c0_59 = arith.constant 0 : index
      %c0_60 = arith.constant 0 : index
      %143 = vector.load %arg12[%c0_59, %c0_60] : memref<2x128xf32, #tpu.memory_space<vmem>>, vector<2x128xf32>
      tpu.vector_store %arg12[%c0_59, %c0_60], %142 {strides = array<i32>} : memref<2x128xf32, #tpu.memory_space<vmem>>, vector<2x128xf32>,
    } else {
    }
    %c0_1 = arith.constant 0 : index
    %c0_2 = arith.constant 0 : index
    %4 = vector.load %arg12[%c0_1, %c0_2] : memref<2x128xf32, #tpu.memory_space<vmem>>, vector<2x128xf32>
    %c2 = arith.constant 2 : index
    %c0_3 = arith.constant 0 : index
    %5 = vector.load %arg2[%c2, %c0_3] : memref<4x128xf32, #tpu.memory_space<vmem>>, vector<1x128xf32>
    %c3 = arith.constant 3 : index
    %c0_4 = arith.constant 0 : index
    %6 = vector.load %arg2[%c3, %c0_4] : memref<4x128xf32, #tpu.memory_space<vmem>>, vector<1x128xf32>
    %c0_5 = arith.constant 0 : index
    %c0_6 = arith.constant 0 : index
    %7 = vector.load %arg3[%c0_5, %c0_6] : memref<5x128xf32, #tpu.memory_space<vmem>>, vector<4x128xf32>
    %c4 = arith.constant 4 : index
    %c0_7 = arith.constant 0 : index
    %8 = vector.load %arg3[%c4, %c0_7] : memref<5x128xf32, #tpu.memory_space<vmem>>, vector<1x128xf32>
    %c0_8 = arith.constant 0 : index
    %c0_9 = arith.constant 0 : index
    %9 = vector.load %arg4[%c0_8, %c0_9] : memref<128x4xf32, #tpu.memory_space<vmem>>, vector<128x4xf32>
    %c0_10 = arith.constant 0 : index
    %c0_11 = arith.constant 0 : index
    %c0_12 = arith.constant 0 : index
    %10 = vector.load %arg5[%c0_10, %c0_11, %c0_12] : memref<1x2x128xf32, #tpu.memory_space<vmem>>, vector<1x1x128xf32>
    %11 = vector.shape_cast %10 : vector<1x1x128xf32> to vector<1x128xf32>
    %c0_13 = arith.constant 0 : index
    %c1 = arith.constant 1 : index
    %c0_14 = arith.constant 0 : index
    %12 = vector.load %arg5[%c0_13, %c1, %c0_14] : memref<1x2x128xf32, #tpu.memory_space<vmem>>, vector<1x1x128xf32>
    %13 = vector.shape_cast %12 : vector<1x1x128xf32> to vector<1x128xf32>
    %14 = arith.mulf %4, %4 : vector<2x128xf32>
    %cst = arith.constant dense<0.000000e+00> : vector<2xf32>
    %15 = vector.multi_reduction <add>, %14, %cst [1] : vector<2x128xf32> to vector<2xf32>
    %16 = vector.shape_cast %15 : vector<2xf32> to vector<2x1xf32>
    %cst_15 = arith.constant 1.280000e+02 : f32
    %17 = vector.broadcast %cst_15 : f32 to vector<2x1xf32>
    %18 = arith.divf %16, %17 : vector<2x1xf32>
    %cst_16 = arith.constant 9.99999974E-6 : f32
    %19 = vector.broadcast %cst_16 : f32 to vector<2x1xf32>
    %20 = arith.addf %18, %19 : vector<2x1xf32>
    %21 = math.rsqrt %20 : vector<2x1xf32>
    %22 = vector.broadcast %21 : vector<2x1xf32> to vector<2x128xf32>
    %23 = arith.mulf %4, %22 : vector<2x128xf32>
    %24 = vector.broadcast %11 : vector<1x128xf32> to vector<2x128xf32>
    %25 = arith.mulf %23, %24 : vector<2x128xf32>
    %26 = arith.truncf %25 : vector<2x128xf32> to vector<2x128xbf16>
    %c0_17 = arith.constant 0 : index
    %c0_18 = arith.constant 0 : index
    %c0_19 = arith.constant 0 : index
    %27 = vector.load %arg6[%c0_17, %c0_18, %c0_19] : memref<1x128x1536xbf16, #tpu.memory_space<vmem>>, vector<1x128x384xbf16>
    %28 = vector.shape_cast %27 : vector<1x128x384xbf16> to vector<128x384xbf16>
    %cst_20 = arith.constant dense<0.000000e+00> : vector<2x384xf32>
    %29 = tpu.matmul %26, %28, %cst_20 {dimension_numbers = #tpu.dot_dimension_numbers<[1], [0], [0], [1], [0, 0, 1, 1], [], []>} : vector<2x128xbf16>, vector<128x384xbf16>, vector<2x384xf32> -> vector<2x384xf32>
    %30 = vector.extract_strided_slice %29 {offsets = [0, 0], sizes = [2, 128], strides = [1, 1]} : vector<2x384xf32> to vector<2x128xf32>
    %31 = vector.extract_strided_slice %29 {offsets = [0, 128], sizes = [2, 128], strides = [1, 1]} : vector<2x384xf32> to vector<2x128xf32>
    %32 = vector.extract_strided_slice %29 {offsets = [0, 256], sizes = [2, 128], strides = [1, 1]} : vector<2x384xf32> to vector<2x128xf32>
    %33 = vector.broadcast %5 : vector<1x128xf32> to vector<2x128xf32>
    %34 = arith.mulf %30, %33 : vector<2x128xf32>
    %c64_i32 = arith.constant 64 : i32
    %35 = tpu.dynamic_rotate %30 by %c64_i32 dim 1 : vector<2x128xf32>, i32 -> vector<2x128xf32>
    %36 = vector.broadcast %6 : vector<1x128xf32> to vector<2x128xf32>
    %37 = arith.mulf %35, %36 : vector<2x128xf32>
    %38 = arith.addf %34, %37 : vector<2x128xf32>
    %39 = vector.broadcast %5 : vector<1x128xf32> to vector<2x128xf32>
    %40 = arith.mulf %31, %39 : vector<2x128xf32>
    %c64_i32_21 = arith.constant 64 : i32
    %41 = tpu.dynamic_rotate %31 by %c64_i32_21 dim 1 : vector<2x128xf32>, i32 -> vector<2x128xf32>
    %42 = vector.broadcast %6 : vector<1x128xf32> to vector<2x128xf32>
    %43 = arith.mulf %41, %42 : vector<2x128xf32>
    %44 = arith.addf %40, %43 : vector<2x128xf32>
    %45 = tpu.concatenate %44, %32 in 1 : vector<2x128xf32>, vector<2x128xf32> -> vector<2x256xf32>
    %46 = arith.truncf %45 : vector<2x256xf32> to vector<2x256xbf16>
    %c0_22 = arith.constant 0 : index
    %c0_23 = arith.constant 0 : index
    %c0_24 = arith.constant 0 : index
    %47 = vector.load %arg11[%c0_22, %c0_23, %c0_24] : memref<1x2x256xbf16, #tpu.memory_space<vmem>>, vector<1x2x256xbf16>
    %48 = vector.shape_cast %47 : vector<1x2x256xbf16> to vector<2x256xbf16>
    %49 = vector.shape_cast %46 : vector<2x256xbf16> to vector<1x2x256xbf16>
    tpu.vector_store %arg11[%c0_22, %c0_23, %c0_24], %49 {strides = array<i32>} : memref<1x2x256xbf16, #tpu.memory_space<vmem>>, vector<1x2x256xbf16>,
    %50 = tpu.iota {dimensions = array<i32: 0>} : vector<16x1xi32>
    %51 = vector.broadcast %0 : i32 to vector<16x1xi32>
    %52 = arith.cmpi eq, %50, %51 : vector<16x1xi32>
    %53 = vector.shape_cast %52 : vector<16x1xi1> to vector<1x16x1xi1>
    %54 = vector.broadcast %0 : i32 to vector<16x1xi32>
    %55 = arith.cmpi sle, %50, %54 : vector<16x1xi32>
    %56 = vector.shape_cast %55 : vector<16x1xi1> to vector<1x16x1xi1>
    %c0_25 = arith.constant 0 : index
    %c0_26 = arith.constant 0 : index
    %c0_27 = arith.constant 0 : index
    %c0_28 = arith.constant 0 : index
    %57 = vector.load %arg8[%c0_25, %c0_26, %c0_27, %c0_28] : memref<1x2x16x256xbf16, #tpu.memory_space<vmem>>, vector<1x2x16x128xbf16>
    %58 = vector.shape_cast %57 : vector<1x2x16x128xbf16> to vector<2x16x128xbf16>
    %59 = arith.extf %58 : vector<2x16x128xbf16> to vector<2x16x128xf32>
    %c0_29 = arith.constant 0 : index
    %c0_30 = arith.constant 0 : index
    %c0_31 = arith.constant 0 : index
    %c128 = arith.constant 128 : index
    %60 = vector.load %arg8[%c0_29, %c0_30, %c0_31, %c128] : memref<1x2x16x256xbf16, #tpu.memory_space<vmem>>, vector<1x2x16x128xbf16>
    %61 = vector.shape_cast %60 : vector<1x2x16x128xbf16> to vector<2x16x128xbf16>
    %62 = arith.extf %61 : vector<2x16x128xbf16> to vector<2x16x128xf32>
    %63 = vector.shape_cast %44 : vector<2x128xf32> to vector<2x1x128xf32>
    %64 = vector.shape_cast %53 : vector<1x16x1xi1> to vector<1x16x1xi1>
    %65 = vector.broadcast %64 : vector<1x16x1xi1> to vector<2x16x128xi1>
    %66 = vector.shape_cast %63 : vector<2x1x128xf32> to vector<2x1x128xf32>
    %67 = vector.broadcast %66 : vector<2x1x128xf32> to vector<2x16x128xf32>
    %68 = arith.select %65, %67, %59 : vector<2x16x128xi1>, vector<2x16x128xf32>
    %69 = vector.shape_cast %32 : vector<2x128xf32> to vector<2x1x128xf32>
    %70 = vector.shape_cast %53 : vector<1x16x1xi1> to vector<1x16x1xi1>
    %71 = vector.broadcast %70 : vector<1x16x1xi1> to vector<2x16x128xi1>
    %72 = vector.shape_cast %69 : vector<2x1x128xf32> to vector<2x1x128xf32>
    %73 = vector.broadcast %72 : vector<2x1x128xf32> to vector<2x16x128xf32>
    %74 = arith.select %71, %73, %62 : vector<2x16x128xi1>, vector<2x16x128xf32>
    %75 = vector.shape_cast %38 : vector<2x128xf32> to vector<2x1x128xf32>
    %76 = vector.broadcast %75 : vector<2x1x128xf32> to vector<2x16x128xf32>
    %77 = arith.mulf %68, %76 : vector<2x16x128xf32>
    %78 = vector.shape_cast %77 : vector<2x16x128xf32> to vector<32x128xf32>
    %cst_32 = arith.constant dense<0.000000e+00> : vector<32x4xf32>
    %79 = tpu.matmul %78, %9, %cst_32 {dimension_numbers = #tpu.dot_dimension_numbers<[1], [0], [0], [1], [0, 0, 1, 1], [], []>} : vector<32x128xf32>, vector<128x4xf32>, vector<32x4xf32> -> vector<32x4xf32>
    %cst_33 = arith.constant 0.176776692 : f32
    %80 = vector.broadcast %cst_33 : f32 to vector<32x4xf32>
    %81 = arith.mulf %79, %80 : vector<32x4xf32>
    %82 = vector.shape_cast %81 : vector<32x4xf32> to vector<2x16x4xf32>
    %cst_34 = arith.constant -1.000000e+30 : f32
    %83 = vector.shape_cast %56 : vector<1x16x1xi1> to vector<1x16x1xi1>
    %84 = vector.broadcast %83 : vector<1x16x1xi1> to vector<2x16x4xi1>
    %85 = vector.broadcast %cst_34 : f32 to vector<2x16x4xf32>
    %86 = arith.select %84, %82, %85 : vector<2x16x4xi1>, vector<2x16x4xf32>
    %cst_35 = arith.constant dense<0xFF800000> : vector<2x4xf32>
    %87 = vector.multi_reduction <maximumf>, %86, %cst_35 [1] : vector<2x16x4xf32> to vector<2x4xf32>
    %88 = vector.shape_cast %87 : vector<2x4xf32> to vector<2x1x4xf32>
    %89 = vector.broadcast %88 : vector<2x1x4xf32> to vector<2x16x4xf32>
    %90 = arith.subf %86, %89 : vector<2x16x4xf32>
    %91 = math.exp %90 : vector<2x16x4xf32>
    %cst_36 = arith.constant dense<0.000000e+00> : vector<2x4xf32>
    %92 = vector.multi_reduction <add>, %91, %cst_36 [1] : vector<2x16x4xf32> to vector<2x4xf32>
    %93 = vector.shape_cast %92 : vector<2x4xf32> to vector<2x1x4xf32>
    %94 = tpu.reciprocal %93 {approx = true} : vector<2x1x4xf32> -> vector<2x1x4xf32>
    %95 = vector.broadcast %94 : vector<2x1x4xf32> to vector<2x16x4xf32>
    %96 = arith.mulf %91, %95 : vector<2x16x4xf32>
    %97 = vector.shape_cast %96 : vector<2x16x4xf32> to vector<32x4xf32>
    %cst_37 = arith.constant dense<0.000000e+00> : vector<32x128xf32>
    %98 = tpu.matmul %97, %7, %cst_37 {dimension_numbers = #tpu.dot_dimension_numbers<[1], [0], [0], [1], [0, 0, 1, 1], [], []>} : vector<32x4xf32>, vector<4x128xf32>, vector<32x128xf32> -> vector<32x128xf32>
    %99 = vector.shape_cast %98 : vector<32x128xf32> to vector<2x16x128xf32>
    %100 = arith.mulf %99, %74 : vector<2x16x128xf32>
    %cst_38 = arith.constant dense<0.000000e+00> : vector<2x128xf32>
    %101 = vector.multi_reduction <add>, %100, %cst_38 [1] : vector<2x16x128xf32> to vector<2x128xf32>
    %102 = arith.truncf %101 : vector<2x128xf32> to vector<2x128xbf16>
    %c0_39 = arith.constant 0 : index
    %c0_40 = arith.constant 0 : index
    %c384 = arith.constant 384 : index
    %103 = vector.load %arg6[%c0_39, %c0_40, %c384] : memref<1x128x1536xbf16, #tpu.memory_space<vmem>>, vector<1x128x128xbf16>
    %104 = vector.shape_cast %103 : vector<1x128x128xbf16> to vector<128x128xbf16>
    %cst_41 = arith.constant dense<0.000000e+00> : vector<2x128xf32>
    %105 = tpu.matmul %102, %104, %cst_41 {dimension_numbers = #tpu.dot_dimension_numbers<[1], [0], [0], [1], [0, 0, 1, 1], [], []>} : vector<2x128xbf16>, vector<128x128xbf16>, vector<2x128xf32> -> vector<2x128xf32>
    %106 = arith.addf %4, %105 : vector<2x128xf32>
    %107 = arith.mulf %106, %106 : vector<2x128xf32>
    %cst_42 = arith.constant dense<0.000000e+00> : vector<2xf32>
    %108 = vector.multi_reduction <add>, %107, %cst_42 [1] : vector<2x128xf32> to vector<2xf32>
    %109 = vector.shape_cast %108 : vector<2xf32> to vector<2x1xf32>
    %cst_43 = arith.constant 1.280000e+02 : f32
    %110 = vector.broadcast %cst_43 : f32 to vector<2x1xf32>
    %111 = arith.divf %109, %110 : vector<2x1xf32>
    %cst_44 = arith.constant 9.99999974E-6 : f32
    %112 = vector.broadcast %cst_44 : f32 to vector<2x1xf32>
    %113 = arith.addf %111, %112 : vector<2x1xf32>
    %114 = math.rsqrt %113 : vector<2x1xf32>
    %115 = vector.broadcast %114 : vector<2x1xf32> to vector<2x128xf32>
    %116 = arith.mulf %106, %115 : vector<2x128xf32>
    %117 = vector.broadcast %13 : vector<1x128xf32> to vector<2x128xf32>
    %118 = arith.mulf %116, %117 : vector<2x128xf32>
    %119 = arith.truncf %118 : vector<2x128xf32> to vector<2x128xbf16>
    %c0_45 = arith.constant 0 : index
    %c0_46 = arith.constant 0 : index
    %c512 = arith.constant 512 : index
    %120 = vector.load %arg6[%c0_45, %c0_46, %c512] : memref<1x128x1536xbf16, #tpu.memory_space<vmem>>, vector<1x128x1024xbf16>
    %121 = vector.shape_cast %120 : vector<1x128x1024xbf16> to vector<128x1024xbf16>
    %cst_47 = arith.constant dense<0.000000e+00> : vector<2x1024xf32>
    %122 = tpu.matmul %119, %121, %cst_47 {dimension_numbers = #tpu.dot_dimension_numbers<[1], [0], [0], [1], [0, 0, 1, 1], [], []>} : vector<2x128xbf16>, vector<128x1024xbf16>, vector<2x1024xf32> -> vector<2x1024xf32>
    %123 = vector.extract_strided_slice %122 {offsets = [0, 0], sizes = [2, 512], strides = [1, 1]} : vector<2x1024xf32> to vector<2x512xf32>
    %124 = vector.extract_strided_slice %122 {offsets = [0, 512], sizes = [2, 512], strides = [1, 1]} : vector<2x1024xf32> to vector<2x512xf32>
    %cst_48 = arith.constant 0.000000e+00 : f32
    %125 = vector.broadcast %cst_48 : f32 to vector<2x512xf32>
    %126 = arith.subf %125, %123 : vector<2x512xf32>
    %127 = math.exp %126 : vector<2x512xf32>
    %cst_49 = arith.constant 1.000000e+00 : f32
    %128 = vector.broadcast %cst_49 : f32 to vector<2x512xf32>
    %129 = arith.addf %128, %127 : vector<2x512xf32>
    %130 = tpu.reciprocal %129 {approx = true} : vector<2x512xf32> -> vector<2x512xf32>
    %131 = arith.mulf %123, %130 : vector<2x512xf32>
    %132 = arith.mulf %131, %124 : vector<2x512xf32>
    %133 = arith.truncf %132 : vector<2x512xf32> to vector<2x512xbf16>
    %c0_50 = arith.constant 0 : index
    %c0_51 = arith.constant 0 : index
    %c0_52 = arith.constant 0 : index
    %134 = vector.load %arg7[%c0_50, %c0_51, %c0_52] : memref<1x512x128xbf16, #tpu.memory_space<vmem>>, vector<1x512x128xbf16>
    %135 = vector.shape_cast %134 : vector<1x512x128xbf16> to vector<512x128xbf16>
    %cst_53 = arith.constant dense<0.000000e+00> : vector<2x128xf32>
    %136 = tpu.matmul %133, %135, %cst_53 {dimension_numbers = #tpu.dot_dimension_numbers<[1], [0], [0], [1], [0, 0, 1, 1], [], []>} : vector<2x512xbf16>, vector<512x128xbf16>, vector<2x128xf32> -> vector<2x128xf32>
    %137 = arith.addf %106, %136 : vector<2x128xf32>
    %c0_54 = arith.constant 0 : index
    %c0_55 = arith.constant 0 : index
    %138 = vector.load %arg12[%c0_54, %c0_55] : memref<2x128xf32, #tpu.memory_space<vmem>>, vector<2x128xf32>
    tpu.vector_store %arg12[%c0_54, %c0_55], %137 {strides = array<i32>} : memref<2x128xf32, #tpu.memory_space<vmem>>, vector<2x128xf32>,
    %c1_i32 = arith.constant 1 : i32
    %139 = arith.cmpi eq, %arg0, %c1_i32 : i32
    %140 = arith.extui %139 : i1 to i32
    %c0_i32_56 = arith.constant 0 : i32
    %141 = arith.cmpi ne, %140, %c0_i32_56 : i32
    scf.if %141 {
      %142 = arith.mulf %137, %137 : vector<2x128xf32>
      %cst_57 = arith.constant dense<0.000000e+00> : vector<2xf32>
      %143 = vector.multi_reduction <add>, %142, %cst_57 [1] : vector<2x128xf32> to vector<2xf32>
      %144 = vector.shape_cast %143 : vector<2xf32> to vector<2x1xf32>
      %cst_58 = arith.constant 1.280000e+02 : f32
      %145 = vector.broadcast %cst_58 : f32 to vector<2x1xf32>
      %146 = arith.divf %144, %145 : vector<2x1xf32>
      %cst_59 = arith.constant 9.99999974E-6 : f32
      %147 = vector.broadcast %cst_59 : f32 to vector<2x1xf32>
      %148 = arith.addf %146, %147 : vector<2x1xf32>
      %149 = math.rsqrt %148 : vector<2x1xf32>
      %150 = vector.broadcast %149 : vector<2x1xf32> to vector<2x128xf32>
      %151 = arith.mulf %137, %150 : vector<2x128xf32>
      %152 = vector.broadcast %8 : vector<1x128xf32> to vector<2x128xf32>
      %153 = arith.mulf %151, %152 : vector<2x128xf32>
      %154 = arith.truncf %153 : vector<2x128xf32> to vector<2x128xbf16>
      %c0_60 = arith.constant 0 : index
      %c0_61 = arith.constant 0 : index
      %155 = vector.load %arg9[%c0_60, %c0_61] : memref<128x256xbf16, #tpu.memory_space<vmem>>, vector<128x256xbf16>
      %cst_62 = arith.constant dense<0.000000e+00> : vector<2x256xf32>
      %156 = tpu.matmul %154, %155, %cst_62 {dimension_numbers = #tpu.dot_dimension_numbers<[1], [0], [0], [1], [0, 0, 1, 1], [], []>} : vector<2x128xbf16>, vector<128x256xbf16>, vector<2x256xf32> -> vector<2x256xf32>
      %c0_63 = arith.constant 0 : index
      %c0_64 = arith.constant 0 : index
      %157 = vector.load %arg10[%c0_63, %c0_64] : memref<2x256xf32, #tpu.memory_space<vmem>>, vector<2x256xf32>
      tpu.vector_store %arg10[%c0_63, %c0_64], %156 {strides = array<i32>} : memref<2x256xf32, #tpu.memory_space<vmem>>, vector<2x256xf32>,
    } else {
    }
    return
  }
  func.func @transform_0(%arg0: i32, %arg1: memref<1xi32, #tpu.memory_space<smem>>) -> (i32, i32) {
    %c0_i32 = arith.constant 0 : i32
    %c0_i32_0 = arith.constant 0 : i32
    %c0_i32_1 = arith.constant 0 : i32
    return %c0_i32, %c0_i32_0 : i32, i32
  }
  func.func @transform_1(%arg0: i32, %arg1: memref<1xi32, #tpu.memory_space<smem>>) -> (i32, i32) {
    %c0_i32 = arith.constant 0 : i32
    %c0_i32_0 = arith.constant 0 : i32
    %c0_i32_1 = arith.constant 0 : i32
    return %c0_i32, %c0_i32_0 : i32, i32
  }
  func.func @transform_2(%arg0: i32, %arg1: memref<1xi32, #tpu.memory_space<smem>>) -> (i32, i32) {
    %c0_i32 = arith.constant 0 : i32
    %c0_i32_0 = arith.constant 0 : i32
    %c0_i32_1 = arith.constant 0 : i32
    return %c0_i32, %c0_i32_0 : i32, i32
  }
  func.func @transform_3(%arg0: i32, %arg1: memref<1xi32, #tpu.memory_space<smem>>) -> (i32, i32, i32) {
    %c0_i32 = arith.constant 0 : i32
    %c0_i32_0 = arith.constant 0 : i32
    %c0_i32_1 = arith.constant 0 : i32
    return %arg0, %c0_i32, %c0_i32_0 : i32, i32, i32
  }
  func.func @transform_4(%arg0: i32, %arg1: memref<1xi32, #tpu.memory_space<smem>>) -> (i32, i32, i32) {
    %c0_i32 = arith.constant 0 : i32
    %c0_i32_0 = arith.constant 0 : i32
    %c0_i32_1 = arith.constant 0 : i32
    return %arg0, %c0_i32, %c0_i32_0 : i32, i32, i32
  }
  func.func @transform_5(%arg0: i32, %arg1: memref<1xi32, #tpu.memory_space<smem>>) -> (i32, i32, i32) {
    %c0_i32 = arith.constant 0 : i32
    %c0_i32_0 = arith.constant 0 : i32
    %c0_i32_1 = arith.constant 0 : i32
    return %arg0, %c0_i32, %c0_i32_0 : i32, i32, i32
  }
  func.func @transform_6(%arg0: i32, %arg1: memref<1xi32, #tpu.memory_space<smem>>) -> (i32, i32, i32, i32) {
    %c0_i32 = arith.constant 0 : i32
    %c0_i32_0 = arith.constant 0 : i32
    %c0_i32_1 = arith.constant 0 : i32
    %c0_i32_2 = arith.constant 0 : i32
    return %arg0, %c0_i32, %c0_i32_0, %c0_i32_1 : i32, i32, i32, i32
  }
  func.func @transform_7(%arg0: i32, %arg1: memref<1xi32, #tpu.memory_space<smem>>) -> (i32, i32) {
    %c0_i32 = arith.constant 0 : i32
    %c0_i32_0 = arith.constant 0 : i32
    %c0_i32_1 = arith.constant 0 : i32
    return %c0_i32, %c0_i32_0 : i32, i32
  }
  func.func @transform_8(%arg0: i32, %arg1: memref<1xi32, #tpu.memory_space<smem>>) -> (i32, i32) {
    %c0_i32 = arith.constant 0 : i32
    %c0_i32_0 = arith.constant 0 : i32
    %c0_i32_1 = arith.constant 0 : i32
    return %c0_i32, %c0_i32_0 : i32, i32
  }
  func.func @transform_9(%arg0: i32, %arg1: memref<1xi32, #tpu.memory_space<smem>>) -> (i32, i32, i32) {
    %c0_i32 = arith.constant 0 : i32
    %c0_i32_0 = arith.constant 0 : i32
    %c0_i32_1 = arith.constant 0 : i32
    return %arg0, %c0_i32, %c0_i32_0 : i32, i32, i32
  }
}

</mosaic_0001>

<llo_original>
// kernel: tile.19
$region0: #{tile.19}
  %s0 = inlined_call_operand.vmem [shape: f32[4,16], index: 0, kind: input, shape index: {}]
  %s1 = inlined_call_operand.vmem [shape: f32[64], index: 1, kind: output, shape index: {}]
  $region1: #{tile.19} parent=0
    #allocation0 [shape = 'u8[4096]{0}', space=vmem, size = 0x1000, scoped, tag = 'scoped mem for output reshape']
    #allocation1 [shape = 'u8[4096]{0}', space=vmem, size = 0x1000, scoped, tag = 'scoped mem for input reshape']
    %s3 = sshll.u32 1, 4
    %s4 = ssub.s32 %s3, 1
    %v5 = vld [vmem:[%s0] sm:%s4]
    %6 = vst [vmem:[#allocation1] sm:%s4] %v5
    %v7 = vld [vmem:[#allocation1] sm:$0x1]
    %vm8 = vcmask 130048
    %9 = vst.msk [vmem:[#allocation0] sm:$0x1] %vm8, %v7
    %s10 = scalar_lea.vmem [#allocation1], 3
    %v11 = vld [vmem:[%s10] sm:$0x1]
    %12 = vrot.lane.b32.xlu0 %v11, 48
    %v13 = vpop.permute.xlu0 %12
    %vm14 = vcmask 523648
    %15 = vst.msk [vmem:[#allocation0] sm:$0x1] %vm14, %v13
    %s16 = scalar_lea.vmem [#allocation1], 2
    %v17 = vld [vmem:[%s16] sm:$0x1]
    %18 = vrot.lane.b32.xlu0 %v17, 32
    %v19 = vpop.permute.xlu0 %18
    %vm20 = vcmask 392448
    %21 = vst.msk [vmem:[#allocation0] sm:$0x1] %vm20, %v19
    %s22 = scalar_lea.vmem [#allocation1], 1
    %v23 = vld [vmem:[%s22] sm:$0x1]
    %24 = vrot.lane.b32.xlu0 %v23, 16
    %v25 = vpop.permute.xlu0 %24
    %vm26 = vcmask 261248
    %27 = vst.msk [vmem:[#allocation0] sm:$0x1] %vm26, %v25
    %s29 = sshll.u32 1, 1
    %s30 = ssub.s32 %s29, 1
    %v32 = vld [vmem:[#allocation0] sm:%s30]
    %s33 = sshll.u32 1, 1
    %s34 = ssub.s32 %s33, 1
    %35 = vst [vmem:[%s1] sm:%s34] %v32

// kernel: neg.1
$region0: #{neg.1}
  #allocation0 [shape = 's32[1]{0}', space=sflag, size = 0x4, scoped, tag = 'scoped memory for neg.1']
  %s0 = inlined_call_operand.vmem [shape: f32[64], index: 0, kind: input, shape index: {}]
  %s1 = inlined_call_operand.vmem [shape: f32[64], index: 1, kind: output, shape index: {}]
  %v2 = vld [vmem:[%s0] sm:$0x1]
  %3 = xla_tuple %v2
  %4 = xla_tuple %3
  %v5 = vxor.u32 %v2, 2147483648
  %6 = xla_tuple %v5
  %7 = vst [vmem:[%s1] sm:$0x1] %v5

// kernel: tile.18
$region0: #{tile.18}
  #allocation0 [shape = 's32[1]{0}', space=sflag, size = 0x4, scoped, tag = 'scoped memory for tile.18']
  %s0 = inlined_call_operand.vmem [shape: f32[16], index: 0, kind: input, shape index: {}]
  %s1 = inlined_call_operand.vmem [shape: f32[4,16], index: 1, kind: output, shape index: {}]
  // Predicated region
  $region2: #{tile.18} parent=0 // pred_check
    _
  $region3: #{tile.18} parent=0 // pred_check_branch
    %3 = sbr.rel (0) target = $region5
  $region4: #{tile.18} parent=0 // pred_region
    _
  $region5: #{tile.18} parent=0 // pred_fallthru
    _
  %v4 = vld [vmem:[%s0] ss:$0 sm:$0xff]
  %5 = vst [vmem:[%s1] sm:$0xf] %v4

// kernel: tile.13
$region0: #{tile.13}
  #allocation0 [shape = 's32[1]{0}', space=sflag, size = 0x4, scoped, tag = 'scoped memory for tile.13']
  %s0 = inlined_call_operand.vmem [shape: f32[16], index: 0, kind: input, shape index: {}]
  %s1 = inlined_call_operand.vmem [shape: f32[8,16], index: 1, kind: output, shape index: {}]
  // Predicated region
  $region2: #{tile.13} parent=0 // pred_check
    _
  $region3: #{tile.13} parent=0 // pred_check_branch
    %3 = sbr.rel (0) target = $region5
  $region4: #{tile.13} parent=0 // pred_region
    _
  $region5: #{tile.13} parent=0 // pred_fallthru
    _
  %v4 = vld [vmem:[%s0] ss:$0 sm:$0xff]
  %5 = vst [vmem:[%s1] sm:$0xff] %v4

// kernel: tile.14
$region0: #{tile.14}
  %s0 = inlined_call_operand.vmem [shape: f32[8,16], index: 0, kind: input, shape index: {}]
  %s1 = inlined_call_operand.vmem [shape: f32[1,128], index: 1, kind: output, shape index: {}]
  $region1: #{tile.14} parent=0
    #allocation0 [shape = 'u8[4096]{0}', space=vmem, size = 0x1000, scoped, tag = 'scoped mem for output reshape']
    %v2 = vld [vmem:[%s0] sm:$0x1]
    %vm3 = vcmask 130048
    %4 = vst.msk [vmem:[#allocation0] sm:$0x1] %vm3, %v2
    %s5 = scalar_lea.vmem %s0, 7
    %v6 = vld [vmem:[%s5] sm:$0x1]
    %7 = vrot.lane.b32.xlu0 %v6, 112
    %v8 = vpop.permute.xlu0 %7
    %vm9 = vcmask 1048448
    %10 = vst.msk [vmem:[#allocation0] sm:$0x1] %vm9, %v8
    %s11 = scalar_lea.vmem %s0, 6
    %v12 = vld [vmem:[%s11] sm:$0x1]
    %13 = vrot.lane.b32.xlu0 %v12, 96
    %v14 = vpop.permute.xlu0 %13
    %vm15 = vcmask 917248
    %16 = vst.msk [vmem:[#allocation0] sm:$0x1] %vm15, %v14
    %s17 = scalar_lea.vmem %s0, 5
    %v18 = vld [vmem:[%s17] sm:$0x1]
    %19 = vrot.lane.b32.xlu0 %v18, 80
    %v20 = vpop.permute.xlu0 %19
    %vm21 = vcmask 786048
    %22 = vst.msk [vmem:[#allocation0] sm:$0x1] %vm21, %v20
    %s23 = scalar_lea.vmem %s0, 4
    %v24 = vld [vmem:[%s23] sm:$0x1]
    %25 = vrot.lane.b32.xlu0 %v24, 64
    %v26 = vpop.permute.xlu0 %25
    %vm27 = vcmask 654848
    %28 = vst.msk [vmem:[#allocation0] sm:$0x1] %vm27, %v26
    %s29 = scalar_lea.vmem %s0, 3
    %v30 = vld [vmem:[%s29] sm:$0x1]
    %31 = vrot.lane.b32.xlu0 %v30, 48
    %v32 = vpop.permute.xlu0 %31
    %vm33 = vcmask 523648
    %34 = vst.msk [vmem:[#allocation0] sm:$0x1] %vm33, %v32
    %s35 = scalar_lea.vmem %s0, 2
    %v36 = vld [vmem:[%s35] sm:$0x1]
    %37 = vrot.lane.b32.xlu0 %v36, 32
    %v38 = vpop.permute.xlu0 %37
    %vm39 = vcmask 392448
    %40 = vst.msk [vmem:[#allocation0] sm:$0x1] %vm39, %v38
    %s41 = scalar_lea.vmem %s0, 1
    %v42 = vld [vmem:[%s41] sm:$0x1]
    %43 = vrot.lane.b32.xlu0 %v42, 16
    %v44 = vpop.permute.xlu0 %43
    %vm45 = vcmask 261248
    %46 = vst.msk [vmem:[#allocation0] sm:$0x1] %vm45, %v44
    %s48 = sshll.u32 1, 1
    %s49 = ssub.s32 %s48, 1
    %v51 = vld [vmem:[#allocation0] sm:%s49]
    %s52 = sshll.u32 1, 1
    %s53 = ssub.s32 %s52, 1
    %54 = vst [vmem:[%s1] sm:%s53] %v51

// kernel: decode_step.1
$region0: #{decode_step.1}
  #allocation0 [shape = 'u32[]', space=smem, size = 0x4, offset = 0x4, fixed_abs, tag = 'smem constant byte address 0x4 - core index']
  #allocation1 [shape = 'u32[144,128]{1,0:T(1,128)}', space=vmem, size = 0x12000, scoped, tag = 'internal scratch']
  #allocation2 [shape = 'f32[2,128]{1,0:T(2,128)}', space=vmem, size = 0x400, scoped, tag = 'scratch operand']
  #allocation3 [shape = 's32[1]{0}', space=sflag, size = 0x4, scoped, tag = 'scoped memory for decode_step.1']
  #allocation4 [shape = 's32[1]{0:T(128)S(6)}', space=smem, size = 0x200, scoped, tag = 'prefetched SMEM operand 0']
  %s0 = inlined_call_operand.<no memory space> [shape: s32[1], index: 0, kind: input, shape index: {}]
  %s1 = inlined_call_operand.vmem [shape: f32[4,128], index: 1, kind: input, shape index: {}]
  %s2 = inlined_call_operand.vmem [shape: f32[5,128], index: 2, kind: input, shape index: {}]
  %s3 = inlined_call_operand.vmem [shape: f32[128,4], index: 3, kind: input, shape index: {}]
  %s4 = inlined_call_operand.vmem [shape: f32[2,2,128], index: 4, kind: input, shape index: {}]
  %s5 = inlined_call_operand.hbm [shape: bf16[2,128,1536], index: 5, kind: input, shape index: {}]
  %s6 = inlined_call_operand.hbm [shape: bf16[2,512,128], index: 6, kind: input, shape index: {}]
  %s7 = inlined_call_operand.vmem [shape: bf16[2,2,16,256], index: 7, kind: input, shape index: {}]
  %s8 = inlined_call_operand.vmem [shape: bf16[128,256], index: 8, kind: input, shape index: {}]
  %s9 = inlined_call_operand.vmem [shape: f32[2,256], index: 9, kind: output, shape index: {0}]
  %s10 = inlined_call_operand.vmem [shape: bf16[2,2,256], index: 10, kind: output, shape index: {1}]
  %11 = xla_tuple %s9, %s10
  %s12 = sld [smem:[#allocation0]]
  $region89: #{decode_step.1} parent=0
    _
  %s14 = ssub.s32 1, %s12
  %s15 = scalar_select 0, %s14, %s12
  %16 = sst [smem:[#allocation4]] %s0
  $region1: #{decode_step.1} parent=0
    #allocation5 [shape = 'u8[786432]{0}', space=vmem, size = 0xc0000, scoped, tag = 'input window, operand 5']
    #allocation6 [shape = 's32[2]{0}', space=sflag, size = 0x8, scoped, tag = 'scoped memory for decode_step.1']
    #allocation7 [shape = 'u8[262144]{0}', space=vmem, size = 0x40000, scoped, tag = 'input window, operand 6']
    #allocation8 [shape = 's32[2]{0}', space=sflag, size = 0x8, scoped, tag = 'scoped memory for decode_step.1']
    %17 = vsyncpa [#allocation6], 0
    %s18 = scalar_lea.sflag [#allocation6], 1
    %19 = vsyncpa %s18, 0
    %20 = vsyncpa [#allocation8], 0
    %s21 = scalar_lea.sflag [#allocation8], 1
    %22 = vsyncpa %s21, 0
    loop: start=0, step=1, limit=4
    $region2: #{decode_step.1} parent=1 // loop_pre_header
      _
    $region3: #{decode_step.1} parent=1 // loop_header
      %s24 = sphi 0, %s28
      %p25 = scmp.ge.s32.totalorder %s24, 4
      %s32 = sphi 0, %s32
      %s34 = sphi 0, %s32
      %s35 = sphi 0, %s34
      %s49 = sphi 0, %s35
      %s53 = sphi 0, %s53
      %s55 = sphi 0, %s53
      %s56 = sphi 0, %s55
      %s70 = sphi 0, %s56
      %s74 = sphi 0, %s74
      %s76 = sphi 0, %s74
      %s77 = sphi 0, %s76
      %s91 = sphi 0, %s77
      %s97 = sphi 0, %s99
      %s100 = sphi 0, %s97
      %s101 = sphi 0, %s100
      %s117 = sphi 0, %s101
      %s123 = sphi 0, %s125
      %s126 = sphi 0, %s123
      %s127 = sphi 0, %s126
      %s143 = sphi 0, %s127
      %s149 = sphi 0, %s151
      %s152 = sphi 0, %s149
      %s153 = sphi 0, %s152
      %s169 = sphi 0, %s153
      %s175 = sphi 0, %s177
      %s178 = sphi 0, %s175
      %s179 = sphi 0, %s178
      %s195 = sphi 0, %s179
      %s199 = sphi 0, %s199
      %s201 = sphi 0, %s199
      %s202 = sphi 0, %s201
      %s216 = sphi 0, %s202
      %s220 = sphi 0, %s220
      %s222 = sphi 0, %s220
      %s223 = sphi 0, %s222
      %s237 = sphi 0, %s223
      %s243 = sphi 0, %s245
      %s246 = sphi 0, %s243
      %s247 = sphi 0, %s246
      %s263 = sphi 0, %s247
    $region4: #{decode_step.1} parent=1 // loop_header_branch
      %27 = sbr.rel (%p25) target = $region8
    $region5: #{decode_step.1} parent=1 // loop_body
      %s29 = ssub.s32 %s24, 1
      %s30 = ssub.s32 %s24, 2
      %s31 = sadd.s32 %s24, 1
      %s33 = sadd.s32 %s32, 1
      %p36 = scmp.eq.s32.totalorder %s24, 1
      %p37 = scmp.ne.s32.totalorder %s32, %s34
      %p38 = scmp.eq.s32.totalorder %s24, 0
      %p39 = por %p37, %p38
      %p40 = scmp.ne.s32.totalorder %s32, %s34
      %p41 = scmp.eq.s32.totalorder %s29, 1
      %p42 = por %p40, %p41
      %p43 = scmp.ne.s32.totalorder %s34, %s35
      %p44 = scmp.eq.s32.totalorder %s29, 0
      %p45 = por %p43, %p44
      %p46 = scmp.ne.s32.totalorder %s34, %s35
      %p47 = scmp.eq.s32.totalorder %s30, 1
      %p48 = por %p46, %p47
      %p50 = scmp.ne.s32.totalorder %s35, %s49
      %p51 = scmp.eq.s32.totalorder %s30, 0
      %p52 = por %p50, %p51
      %s54 = sadd.s32 %s53, 1
      %p57 = scmp.eq.s32.totalorder %s24, 1
      %p58 = scmp.ne.s32.totalorder %s53, %s55
      %p59 = scmp.eq.s32.totalorder %s24, 0
      %p60 = por %p58, %p59
      %p61 = scmp.ne.s32.totalorder %s53, %s55
      %p62 = scmp.eq.s32.totalorder %s29, 1
      %p63 = por %p61, %p62
      %p64 = scmp.ne.s32.totalorder %s55, %s56
      %p65 = scmp.eq.s32.totalorder %s29, 0
      %p66 = por %p64, %p65
      %p67 = scmp.ne.s32.totalorder %s55, %s56
      %p68 = scmp.eq.s32.totalorder %s30, 1
      %p69 = por %p67, %p68
      %p71 = scmp.ne.s32.totalorder %s56, %s70
      %p72 = scmp.eq.s32.totalorder %s30, 0
      %p73 = por %p71, %p72
      %s75 = sadd.s32 %s74, 1
      %p78 = scmp.eq.s32.totalorder %s24, 1
      %p79 = scmp.ne.s32.totalorder %s74, %s76
      %p80 = scmp.eq.s32.totalorder %s24, 0
      %p81 = por %p79, %p80
      %p82 = scmp.ne.s32.totalorder %s74, %s76
      %p83 = scmp.eq.s32.totalorder %s29, 1
      %p84 = por %p82, %p83
      %p85 = scmp.ne.s32.totalorder %s76, %s77
      %p86 = scmp.eq.s32.totalorder %s29, 0
      %p87 = por %p85, %p86
      %p88 = scmp.ne.s32.totalorder %s76, %s77
      %p89 = scmp.eq.s32.totalorder %s30, 1
      %p90 = por %p88, %p89
      %p92 = scmp.ne.s32.totalorder %s77, %s91
      %p93 = scmp.eq.s32.totalorder %s30, 0
      %p94 = por %p92, %p93
      %s95 = ssub.s32 %s24, %s31
      %p96 = scmp.eq.s32.totalorder %s95, 0
      %s98 = sadd.s32 %s97, 1
      %s99 = scalar_select %p96, %s97, %s98
      %p102 = pneg %p96
      %p103 = scmp.eq.s32.totalorder %s24, 1
      %p104 = por %p102, %p103
      %p105 = scmp.ne.s32.totalorder %s97, %s100
      %p106 = scmp.eq.s32.totalorder %s24, 0
      %p107 = por %p105, %p106
      %p108 = scmp.ne.s32.totalorder %s97, %s100
      %p109 = scmp.eq.s32.totalorder %s29, 1
      %p110 = por %p108, %p109
      %p111 = scmp.ne.s32.totalorder %s100, %s101
      %p112 = scmp.eq.s32.totalorder %s29, 0
      %p113 = por %p111, %p112
      %p114 = scmp.ne.s32.totalorder %s100, %s101
      %p115 = scmp.eq.s32.totalorder %s30, 1
      %p116 = por %p114, %p115
      %p118 = scmp.ne.s32.totalorder %s101, %s117
      %p119 = scmp.eq.s32.totalorder %s30, 0
      %p120 = por %p118, %p119
      %s121 = ssub.s32 %s24, %s31
      %p122 = scmp.eq.s32.totalorder %s121, 0
      %s124 = sadd.s32 %s123, 1
      %s125 = scalar_select %p122, %s123, %s124
      %p128 = pneg %p122
      %p129 = scmp.eq.s32.totalorder %s24, 1
      %p130 = por %p128, %p129
      %p131 = scmp.ne.s32.totalorder %s123, %s126
      %p132 = scmp.eq.s32.totalorder %s24, 0
      %p133 = por %p131, %p132
      %p134 = scmp.ne.s32.totalorder %s123, %s126
      %p135 = scmp.eq.s32.totalorder %s29, 1
      %p136 = por %p134, %p135
      %p137 = scmp.ne.s32.totalorder %s126, %s127
      %p138 = scmp.eq.s32.totalorder %s29, 0
      %p139 = por %p137, %p138
      %p140 = scmp.ne.s32.totalorder %s126, %s127
      %p141 = scmp.eq.s32.totalorder %s30, 1
      %p142 = por %p140, %p141
      %p144 = scmp.ne.s32.totalorder %s127, %s143
      %p145 = scmp.eq.s32.totalorder %s30, 0
      %p146 = por %p144, %p145
      %s147 = ssub.s32 %s24, %s31
      %p148 = scmp.eq.s32.totalorder %s147, 0
      %s150 = sadd.s32 %s149, 1
      %s151 = scalar_select %p148, %s149, %s150
      %p154 = pneg %p148
      %p155 = scmp.eq.s32.totalorder %s24, 1
      %p156 = por %p154, %p155
      %p157 = scmp.ne.s32.totalorder %s149, %s152
      %p158 = scmp.eq.s32.totalorder %s24, 0
      %p159 = por %p157, %p158
      %p160 = scmp.ne.s32.totalorder %s149, %s152
      %p161 = scmp.eq.s32.totalorder %s29, 1
      %p162 = por %p160, %p161
      %p163 = scmp.ne.s32.totalorder %s152, %s153
      %p164 = scmp.eq.s32.totalorder %s29, 0
      %p165 = por %p163, %p164
      %p166 = scmp.ne.s32.totalorder %s152, %s153
      %p167 = scmp.eq.s32.totalorder %s30, 1
      %p168 = por %p166, %p167
      %p170 = scmp.ne.s32.totalorder %s153, %s169
      %p171 = scmp.eq.s32.totalorder %s30, 0
      %p172 = por %p170, %p171
      %s173 = ssub.s32 %s24, %s31
      %p174 = scmp.eq.s32.totalorder %s173, 0
      %s176 = sadd.s32 %s175, 1
      %s177 = scalar_select %p174, %s175, %s176
      %p180 = pneg %p174
      %p181 = scmp.eq.s32.totalorder %s24, 1
      %p182 = por %p180, %p181
      %p183 = scmp.ne.s32.totalorder %s175, %s178
      %p184 = scmp.eq.s32.totalorder %s24, 0
      %p185 = por %p183, %p184
      %p186 = scmp.ne.s32.totalorder %s175, %s178
      %p187 = scmp.eq.s32.totalorder %s29, 1
      %p188 = por %p186, %p187
      %p189 = scmp.ne.s32.totalorder %s178, %s179
      %p190 = scmp.eq.s32.totalorder %s29, 0
      %p191 = por %p189, %p190
      %p192 = scmp.ne.s32.totalorder %s178, %s179
      %p193 = scmp.eq.s32.totalorder %s30, 1
      %p194 = por %p192, %p193
      %p196 = scmp.ne.s32.totalorder %s179, %s195
      %p197 = scmp.eq.s32.totalorder %s30, 0
      %p198 = por %p196, %p197
      %s200 = sadd.s32 %s199, 1
      %p203 = scmp.eq.s32.totalorder %s24, 1
      %p204 = scmp.ne.s32.totalorder %s199, %s201
      %p205 = scmp.eq.s32.totalorder %s24, 0
      %p206 = por %p204, %p205
      %p207 = scmp.ne.s32.totalorder %s199, %s201
      %p208 = scmp.eq.s32.totalorder %s29, 1
      %p209 = por %p207, %p208
      %p210 = scmp.ne.s32.totalorder %s201, %s202
      %p211 = scmp.eq.s32.totalorder %s29, 0
      %p212 = por %p210, %p211
      %p213 = scmp.ne.s32.totalorder %s201, %s202
      %p214 = scmp.eq.s32.totalorder %s30, 1
      %p215 = por %p213, %p214
      %p217 = scmp.ne.s32.totalorder %s202, %s216
      %p218 = scmp.eq.s32.totalorder %s30, 0
      %p219 = por %p217, %p218
      %s221 = sadd.s32 %s220, 1
      %p224 = scmp.eq.s32.totalorder %s24, 1
      %p225 = scmp.ne.s32.totalorder %s220, %s222
      %p226 = scmp.eq.s32.totalorder %s24, 0
      %p227 = por %p225, %p226
      %p228 = scmp.ne.s32.totalorder %s220, %s222
      %p229 = scmp.eq.s32.totalorder %s29, 1
      %p230 = por %p228, %p229
      %p231 = scmp.ne.s32.totalorder %s222, %s223
      %p232 = scmp.eq.s32.totalorder %s29, 0
      %p233 = por %p231, %p232
      %p234 = scmp.ne.s32.totalorder %s222, %s223
      %p235 = scmp.eq.s32.totalorder %s30, 1
      %p236 = por %p234, %p235
      %p238 = scmp.ne.s32.totalorder %s223, %s237
      %p239 = scmp.eq.s32.totalorder %s30, 0
      %p240 = por %p238, %p239
      %s241 = ssub.s32 %s24, %s31
      %p242 = scmp.eq.s32.totalorder %s241, 0
      %s244 = sadd.s32 %s243, 1
      %s245 = scalar_select %p242, %s243, %s244
      %p248 = pneg %p242
      %p249 = scmp.eq.s32.totalorder %s24, 1
      %p250 = por %p248, %p249
      %p251 = scmp.ne.s32.totalorder %s243, %s246
      %p252 = scmp.eq.s32.totalorder %s24, 0
      %p253 = por %p251, %p252
      %p254 = scmp.ne.s32.totalorder %s243, %s246
      %p255 = scmp.eq.s32.totalorder %s29, 1
      %p256 = por %p254, %p255
      %p257 = scmp.ne.s32.totalorder %s246, %s247
      %p258 = scmp.eq.s32.totalorder %s29, 0
      %p259 = por %p257, %p258
      %p260 = scmp.ne.s32.totalorder %s246, %s247
      %p261 = scmp.eq.s32.totalorder %s30, 1
      %p262 = por %p260, %p261
      %p264 = scmp.ne.s32.totalorder %s247, %s263
      %p265 = scmp.eq.s32.totalorder %s30, 0
      %p266 = por %p264, %p265
      %p267 = scmp.le.s32.totalorder 1, %s24
      %p268 = scmp.lt.s32.totalorder %s24, 3
      %p269 = pnand %p267, %p268
      %p270 = pneg %p269
      // Predicated region
      $region9: #{decode_step.1} parent=5 // pred_check
        _
      $region10: #{decode_step.1} parent=5 // pred_check_branch
        %272 = sbr.rel (%p269) target = $region12
      $region11: #{decode_step.1} parent=5 // pred_region
        %s273 = ssub.s32 %s24, 1
        // Predicated region
        $region13: #{decode_step.1} parent=11 // pred_check
          %p274 = pneg %p45
        $region14: #{decode_step.1} parent=11 // pred_check_branch
          %276 = sbr.rel (%p274) target = $region16
        $region15: #{decode_step.1} parent=11 // pred_region
          _
        $region16: #{decode_step.1} parent=11 // pred_fallthru
          _
        // Predicated region
        $region17: #{decode_step.1} parent=11 // pred_check
          %p277 = pneg %p66
        $region18: #{decode_step.1} parent=11 // pred_check_branch
          %279 = sbr.rel (%p277) target = $region20
        $region19: #{decode_step.1} parent=11 // pred_region
          _
        $region20: #{decode_step.1} parent=11 // pred_fallthru
          _
        // Predicated region
        $region21: #{decode_step.1} parent=11 // pred_check
          %p280 = pneg %p87
        $region22: #{decode_step.1} parent=11 // pred_check_branch
          %282 = sbr.rel (%p280) target = $region24
        $region23: #{decode_step.1} parent=11 // pred_region
          _
        $region24: #{decode_step.1} parent=11 // pred_fallthru
          _
        // Predicated region
        $region25: #{decode_step.1} parent=11 // pred_check
          %p283 = pneg %p212
        $region26: #{decode_step.1} parent=11 // pred_check_branch
          %285 = sbr.rel (%p283) target = $region28
        $region27: #{decode_step.1} parent=11 // pred_region
          _
        $region28: #{decode_step.1} parent=11 // pred_fallthru
          _
      $region12: #{decode_step.1} parent=5 // pred_fallthru
        _
      %p286 = scmp.lt.s32.totalorder %s24, 2
      // Predicated region
      $region29: #{decode_step.1} parent=5 // pred_check
        %p287 = pneg %p286
      $region30: #{decode_step.1} parent=5 // pred_check_branch
        %289 = sbr.rel (%p287) target = $region32
      $region31: #{decode_step.1} parent=5 // pred_region
        // Predicated region
        $region33: #{decode_step.1} parent=31 // pred_check
          %p290 = pneg %p107
        $region34: #{decode_step.1} parent=31 // pred_check_branch
          %292 = sbr.rel (%p290) target = $region36
        $region35: #{decode_step.1} parent=31 // pred_region
          %p293 = scmp.lt.s32.totalorder %s24, 1
          %s294 = scalar_select %p293, %s24, 1
          %s295 = smul.addr %s294, 2
          %s296 = scalar_lea.vmem %s4, %s295
        $region36: #{decode_step.1} parent=31 // pred_fallthru
          _
        // Predicated region
        $region37: #{decode_step.1} parent=31 // pred_check
          %p297 = pneg %p133
        $region38: #{decode_step.1} parent=31 // pred_check_branch
          %299 = sbr.rel (%p297) target = $region40
        $region39: #{decode_step.1} parent=31 // pred_region
          %s300 = sand.u32 %s123, 1
          %s301 = scalar_lea.sflag [#allocation6], %s300
          %s302 = sand.u32 %s123, 1
          %s303 = smul.addr %s302, 768
          %s304 = scalar_lea.vmem [#allocation5], %s303
          %s306 = ssub.s32 12288, 12288
          %307 = vsyncadd %s301, %s306
          %s308 = smul.addr %s24, 192
          %s309 = smul.addr %s308, 64
          %s310 = scalar_lea.hbm %s5, %s309
          %s311 = sshll.u32 %s304, 4
          %s312 = int_to_ptr.vmem [resolvable:$true] %s311
          %317 = dma.hbm_to_vmem [thread:$0]  %s310, 12288, %s312, %s301, 768, 768, 48
        $region40: #{decode_step.1} parent=31 // pred_fallthru
          _
        // Predicated region
        $region41: #{decode_step.1} parent=31 // pred_check
          %p318 = pneg %p159
        $region42: #{decode_step.1} parent=31 // pred_check_branch
          %320 = sbr.rel (%p318) target = $region44
        $region43: #{decode_step.1} parent=31 // pred_region
          %s321 = sand.u32 %s149, 1
          %s322 = scalar_lea.sflag [#allocation8], %s321
          %s323 = sand.u32 %s149, 1
          %s324 = smul.addr %s323, 256
          %s325 = scalar_lea.vmem [#allocation7], %s324
          %s327 = ssub.s32 4096, 4096
          %328 = vsyncadd %s322, %s327
          %s329 = smul.addr %s24, 64
          %s330 = smul.addr %s329, 64
          %s331 = scalar_lea.hbm %s6, %s330
          %s332 = sshll.u32 %s325, 4
          %s333 = int_to_ptr.vmem [resolvable:$true] %s332
          %338 = dma.hbm_to_vmem [thread:$0]  %s331, 4096, %s333, %s322, 64, 64, 4
        $region44: #{decode_step.1} parent=31 // pred_fallthru
          _
        // Predicated region
        $region45: #{decode_step.1} parent=31 // pred_check
          %p339 = pneg %p185
        $region46: #{decode_step.1} parent=31 // pred_check_branch
          %341 = sbr.rel (%p339) target = $region48
        $region47: #{decode_step.1} parent=31 // pred_region
          %p342 = scmp.lt.s32.totalorder %s24, 1
          %s343 = scalar_select %p342, %s24, 1
          %s344 = smul.addr %s343, 8
          %s345 = smul.addr %s344, 4
          %s346 = scalar_lea.vmem %s7, %s345
        $region48: #{decode_step.1} parent=31 // pred_fallthru
          _
      $region32: #{decode_step.1} parent=5 // pred_fallthru
        _
      %p347 = scmp.le.s32.totalorder 1, %s24
      %p348 = scmp.lt.s32.totalorder %s24, 3
      %p349 = pnand %p347, %p348
      %p350 = pneg %p349
      // Predicated region
      $region49: #{decode_step.1} parent=5 // pred_check
        _
      $region50: #{decode_step.1} parent=5 // pred_check_branch
        %352 = sbr.rel (%p349) target = $region52
      $region51: #{decode_step.1} parent=5 // pred_region
        %s353 = ssub.s32 %s24, 1
        %s354 = sand.u32 %s126, 1
        %s355 = scalar_lea.sflag [#allocation6], %s354
        %s356 = sand.u32 %s126, 1
        %s357 = smul.addr %s356, 768
        %s358 = scalar_lea.vmem [#allocation5], %s357
        // Predicated region
        $region53: #{decode_step.1} parent=51 // pred_check
          %p359 = pneg %p139
        $region54: #{decode_step.1} parent=51 // pred_check_branch
          %361 = sbr.rel (%p359) target = $region56
        $region55: #{decode_step.1} parent=51 // pred_region
          %362 = dma.done %s355, 12288
        $region56: #{decode_step.1} parent=51 // pred_fallthru
          _
        %s363 = sand.u32 %s152, 1
        %s364 = scalar_lea.sflag [#allocation8], %s363
        %s365 = sand.u32 %s152, 1
        %s366 = smul.addr %s365, 256
        %s367 = scalar_lea.vmem [#allocation7], %s366
        // Predicated region
        $region57: #{decode_step.1} parent=51 // pred_check
          %p368 = pneg %p165
        $region58: #{decode_step.1} parent=51 // pred_check_branch
          %370 = sbr.rel (%p368) target = $region60
        $region59: #{decode_step.1} parent=51 // pred_region
          %371 = dma.done %s364, 4096
        $region60: #{decode_step.1} parent=51 // pred_fallthru
          _
        %p372 = pneg %p45
        %p373 = pneg %p42
        %p374 = pneg %p66
        %p375 = pneg %p63
        %p376 = pneg %p87
        %p377 = pneg %p84
        %p378 = scmp.lt.s32.totalorder %s29, 1
        %s379 = scalar_select %p378, %s29, 1
        %s380 = smul.addr %s379, 2
        %s381 = scalar_lea.vmem %s4, %s380
        %p382 = pneg %p113
        %p383 = pneg %p110
        %s384 = sand.u32 %s126, 1
        %s385 = scalar_lea.sflag [#allocation6], %s384
        %s386 = sand.u32 %s126, 1
        %s387 = smul.addr %s386, 768
        %s388 = scalar_lea.vmem [#allocation5], %s387
        %p389 = pneg %p139
        %p390 = pneg %p136
        %s391 = sand.u32 %s152, 1
        %s392 = scalar_lea.sflag [#allocation8], %s391
        %s393 = sand.u32 %s152, 1
        %s394 = smul.addr %s393, 256
        %s395 = scalar_lea.vmem [#allocation7], %s394
        %p396 = pneg %p165
        %p397 = pneg %p162
        %p398 = scmp.lt.s32.totalorder %s29, 1
        %s399 = scalar_select %p398, %s29, 1
        %s400 = smul.addr %s399, 8
        %s401 = smul.addr %s400, 4
        %s402 = scalar_lea.vmem %s7, %s401
        %p403 = pneg %p191
        %p404 = pneg %p188
        %p405 = pneg %p212
        %p406 = pneg %p209
        %p407 = pneg %p233
        %p408 = pneg %p230
        %p409 = pneg %p259
        %p410 = pneg %p256
        %p411 = scmp.lt.s32.totalorder %s29, 1
        %s412 = scalar_select %p411, %s29, 1
        %s413 = smul.addr %s412, 2
        %s414 = scalar_lea.vmem %s10, %s413
        %p415 = scmp.lt.s32.totalorder %s29, 1
        %s416 = scalar_select %p415, %s29, 1
        %s417 = smul.addr %s416, 2
        %s418 = scalar_lea.vmem %s4, %s417
        %p419 = scmp.lt.s32.totalorder %s29, 1
        %s420 = scalar_select %p419, %s29, 1
        %s421 = smul.addr %s420, 8
        %s422 = smul.addr %s421, 4
        %s423 = scalar_lea.vmem %s7, %s422
        %p424 = scmp.lt.s32.totalorder %s29, 1
        %s425 = scalar_select %p424, %s29, 1
        %s426 = smul.addr %s425, 2
        %s427 = scalar_lea.vmem %s10, %s426
        %s429 = sld [smem:[#allocation4]]
        %p430 = scmp.eq.s32.totalorder %s29, 0
        // Predicated region
        $region61: #{decode_step.1} parent=51 // pred_check
          %p431 = pneg %p430
        $region62: #{decode_step.1} parent=51 // pred_check_branch
          %433 = sbr.rel (%p431) target = $region64
        $region63: #{decode_step.1} parent=51 // pred_region
          %v434 = vld [vmem:[%s1] sm:$0x3]
          %435 = vst [vmem:[#allocation2] sm:$0x3] %v434
        $region64: #{decode_step.1} parent=51 // pred_fallthru
          _
        %v436 = vld [vmem:[#allocation2] sm:$0x3]
        %v437 = vld [vmem:[%s1 + $0x2] sm:$0x1]
        %v438 = vld [vmem:[%s1 + $0x3] sm:$0x1]
        %v439 = vld [vmem:[%s2] sm:$0xf]
        %v440 = vld [vmem:[%s2 + $0x4] sm:$0x1]
        %v441 = vld [vmem:[%s3] sm:$0xff]
        %v442 = vld [vmem:[%s3 + $0x8] sm:$0xff]
        %v443 = vld [vmem:[%s3 + $0x10] sm:$0xff]
        %v444 = vld [vmem:[%s3 + $0x18] sm:$0xff]
        %v445 = vld [vmem:[%s3 + $0x20] sm:$0xff]
        %v446 = vld [vmem:[%s3 + $0x28] sm:$0xff]
        %v447 = vld [vmem:[%s3 + $0x30] sm:$0xff]
        %v448 = vld [vmem:[%s3 + $0x38] sm:$0xff]
        %v449 = vld [vmem:[%s3 + $0x40] sm:$0xff]
        %v450 = vld [vmem:[%s3 + $0x48] sm:$0xff]
        %v451 = vld [vmem:[%s3 + $0x50] sm:$0xff]
        %v452 = vld [vmem:[%s3 + $0x58] sm:$0xff]
        %v453 = vld [vmem:[%s3 + $0x60] sm:$0xff]
        %v454 = vld [vmem:[%s3 + $0x68] sm:$0xff]
        %v455 = vld [vmem:[%s3 + $0x70] sm:$0xff]
        %v456 = vld [vmem:[%s3 + $0x78] sm:$0xff]
        %v457 = vld [vmem:[%s418] sm:$0x1]
        %v458 = vld [vmem:[%s418 + $0x1] sm:$0x1]
        %v459 = vmul.f32 %v436, %v436
        %vm460 = vcmask 1041408
        %v461 = vsel %vm460, %v459, 0.0
        %462 = vadd.xlane.f32.xlu0 %v461
        %v463 = vpop.xlane.xlu0 %462
        %v464 = vrcp.pop 128.0
        %v465 = vmul.f32 %v463, %v464
        %v466 = vadd.f32 %v465, 1e-05
        %v467 = vrsqrt.pop %v466
        %v468 = vmul.f32 %v436, %v467
        %v469 = vlaneseq
        %v470 = vshrl.u32 %v469, 7
        %v471 = vsub.s32 0, %v470
        %v472 = vrot.slane %v457, %v471
        %v473 = vmul.f32 %v468, %v472
        %v474 = vpack.c.bf16 %v473, %v473
        %v475 = vld [vmem:[%s358] sm:$0xff]
        %v476 = vld [vmem:[%s358 + $0x8] sm:$0xf]
        %v477 = vld [vmem:[%s358 + $0x30] sm:$0xff]
        %v478 = vld [vmem:[%s358 + $0x38] sm:$0xf]
        %v479 = vld [vmem:[%s358 + $0x60] sm:$0xff]
        %v480 = vld [vmem:[%s358 + $0x68] sm:$0xf]
        %v481 = vld [vmem:[%s358 + $0x90] sm:$0xff]
        %v482 = vld [vmem:[%s358 + $0x98] sm:$0xf]
        %v483 = vld [vmem:[%s358 + $0xc0] sm:$0xff]
        %v484 = vld [vmem:[%s358 + $0xc8] sm:$0xf]
        %v485 = vld [vmem:[%s358 + $0xf0] sm:$0xff]
        %v486 = vld [vmem:[%s358 + $0xf8] sm:$0xf]
        %v487 = vld [vmem:[%s358 + $0x120] sm:$0xff]
        %v488 = vld [vmem:[%s358 + $0x128] sm:$0xf]
        %v489 = vld [vmem:[%s358 + $0x150] sm:$0xff]
        %v490 = vld [vmem:[%s358 + $0x158] sm:$0xf]
        %v491 = vld [vmem:[%s358 + $0x180] sm:$0xff]
        %v492 = vld [vmem:[%s358 + $0x188] sm:$0xf]
        %v493 = vld [vmem:[%s358 + $0x1b0] sm:$0xff]
        %v494 = vld [vmem:[%s358 + $0x1b8] sm:$0xf]
        %v495 = vld [vmem:[%s358 + $0x1e0] sm:$0xff]
        %v496 = vld [vmem:[%s358 + $0x1e8] sm:$0xf]
        %v497 = vld [vmem:[%s358 + $0x210] sm:$0xff]
        %v498 = vld [vmem:[%s358 + $0x218] sm:$0xf]
        %v499 = vld [vmem:[%s358 + $0x240] sm:$0xff]
        %v500 = vld [vmem:[%s358 + $0x248] sm:$0xf]
        %v501 = vld [vmem:[%s358 + $0x270] sm:$0xff]
        %v502 = vld [vmem:[%s358 + $0x278] sm:$0xf]
        %v503 = vld [vmem:[%s358 + $0x2a0] sm:$0xff]
        %v504 = vld [vmem:[%s358 + $0x2a8] sm:$0xf]
        %v505 = vld [vmem:[%s358 + $0x2d0] sm:$0xff]
        %v506 = vld [vmem:[%s358 + $0x2d8] sm:$0xf]
        %v539 = vunpack.c.l.b16 %v475
        %v540 = vunpack.c.h.b16 %v475
        %v541 = vunpack.c.l.b16 %v476
        %v542 = vunpack.c.l.b16 %v477
        %v543 = vunpack.c.h.b16 %v477
        %v544 = vunpack.c.l.b16 %v478
        %v545 = vunpack.c.l.b16 %v479
        %v546 = vunpack.c.h.b16 %v479
        %v547 = vunpack.c.l.b16 %v480
        %v548 = vunpack.c.l.b16 %v481
        %v549 = vunpack.c.h.b16 %v481
        %v550 = vunpack.c.l.b16 %v482
        %v551 = vunpack.c.l.b16 %v483
        %v552 = vunpack.c.h.b16 %v483
        %v553 = vunpack.c.l.b16 %v484
        %v554 = vunpack.c.l.b16 %v485
        %v555 = vunpack.c.h.b16 %v485
        %v556 = vunpack.c.l.b16 %v486
        %v557 = vunpack.c.l.b16 %v487
        %v558 = vunpack.c.h.b16 %v487
        %v559 = vunpack.c.l.b16 %v488
        %v560 = vunpack.c.l.b16 %v489
        %v561 = vunpack.c.h.b16 %v489
        %v562 = vunpack.c.l.b16 %v490
        %v563 = vunpack.c.l.b16 %v491
        %v564 = vunpack.c.h.b16 %v491
        %v565 = vunpack.c.l.b16 %v492
        %v566 = vunpack.c.l.b16 %v493
        %v567 = vunpack.c.h.b16 %v493
        %v568 = vunpack.c.l.b16 %v494
        %v569 = vunpack.c.l.b16 %v495
        %v570 = vunpack.c.h.b16 %v495
        %v571 = vunpack.c.l.b16 %v496
        %v572 = vunpack.c.l.b16 %v497
        %v573 = vunpack.c.h.b16 %v497
        %v574 = vunpack.c.l.b16 %v498
        %v575 = vunpack.c.l.b16 %v499
        %v576 = vunpack.c.h.b16 %v499
        %v577 = vunpack.c.l.b16 %v500
        %v578 = vunpack.c.l.b16 %v501
        %v579 = vunpack.c.h.b16 %v501
        %v580 = vunpack.c.l.b16 %v502
        %v581 = vunpack.c.l.b16 %v503
        %v582 = vunpack.c.h.b16 %v503
        %v583 = vunpack.c.l.b16 %v504
        %v584 = vunpack.c.l.b16 %v505
        %v585 = vunpack.c.h.b16 %v505
        %v586 = vunpack.c.l.b16 %v506
        %v587 = vpack.c.b16 %v542, %v539
        %v588 = vpack.c.b16 %v543, %v540
        %v589 = vpack.c.b16 %v544, %v541
        %v590 = vpack.c.b16 %v548, %v545
        %v591 = vpack.c.b16 %v549, %v546
        %v592 = vpack.c.b16 %v550, %v547
        %v593 = vpack.c.b16 %v554, %v551
        %v594 = vpack.c.b16 %v555, %v552
        %v595 = vpack.c.b16 %v556, %v553
        %v596 = vpack.c.b16 %v560, %v557
        %v597 = vpack.c.b16 %v561, %v558
        %v598 = vpack.c.b16 %v562, %v559
        %v599 = vpack.c.b16 %v566, %v563
        %v600 = vpack.c.b16 %v567, %v564
        %v601 = vpack.c.b16 %v568, %v565
        %v602 = vpack.c.b16 %v572, %v569
        %v603 = vpack.c.b16 %v573, %v570
        %v604 = vpack.c.b16 %v574, %v571
        %v605 = vpack.c.b16 %v578, %v575
        %v606 = vpack.c.b16 %v579, %v576
        %v607 = vpack.c.b16 %v580, %v577
        %v608 = vpack.c.b16 %v584, %v581
        %v609 = vpack.c.b16 %v585, %v582
        %v610 = vpack.c.b16 %v586, %v583
        %635 = vmatprep.subr.bf16.mxu0 %v609
        %636 = vmatpush1.bf16.msra.mxu0 %v608
        %637 = vmatprep.subr.bf16.mxu0 %v606
        %638 = vmatpush1.bf16.msra.mxu0 %v605
        %639 = vmatprep.subr.bf16.mxu0 %v603
        %640 = vmatpush1.bf16.msra.mxu0 %v602
        %641 = vmatprep.subr.bf16.mxu0 %v600
        %642 = vmatpush1.bf16.msra.mxu0 %v599
        %643 = vmatprep.subr.bf16.mxu0 %v597
        %644 = vmatpush1.bf16.msra.mxu0 %v596
        %645 = vmatprep.subr.bf16.mxu0 %v594
        %646 = vmatpush1.bf16.msra.mxu0 %v593
        %647 = vmatprep.subr.bf16.mxu0 %v591
        %648 = vmatpush1.bf16.msra.mxu0 %v590
        %649 = vmatprep.subr.bf16.mxu0 %v588
        %650 = vmatpush1.bf16.msra.mxu0 %v587
        %651 = vmatprep.subr.bf16.mxu0 0
        %652 = vmatpush2.bf16.msra.mxu0 0
        %653 = vmatprep.subr.bf16.mxu0 0
        %654 = vmatpush2.bf16.msra.mxu0 0
        %655 = vmatprep.subr.bf16.mxu0 0
        %656 = vmatpush2.bf16.msra.mxu0 0
        %657 = vmatprep.subr.bf16.mxu0 0
        %658 = vmatpush2.bf16.msra.mxu0 0
        %659 = vmatprep.subr.bf16.mxu0 0
        %660 = vmatpush2.bf16.msra.mxu0 0
        %661 = vmatprep.subr.bf16.mxu0 0
        %662 = vmatpush2.bf16.msra.mxu0 0
        %663 = vmatprep.subr.bf16.mxu0 0
        %664 = vmatpush2.bf16.msra.mxu0 0
        %665 = vmatprep.subr.bf16.mxu0 0
        %666 = vmatpush2.bf16.msra.mxu0 0
        %667 = vmatprep.mubr.bf16.mxu0 0
        %668 = vmatmul.mubr.bf16.gmra.mxu0 %v474
        %v669 = vpop.f32.mrf.mxu0
        %v670 = vadd.f32 0.0, %v669
        %v671 = vpop.f32.mrf.mxu0
        %v672 = vadd.f32 0.0, %v671
        %v673 = vpop.f32.mrf.mxu0
        %v674 = vpop.f32.mrf.mxu0
        %675 = vdwg.mxu0
        %676 = vmatprep.subr.bf16.mxu0 0
        %677 = vmatpush1.bf16.msra.mxu0 %v610
        %678 = vmatprep.subr.bf16.mxu0 0
        %679 = vmatpush1.bf16.msra.mxu0 %v607
        %680 = vmatprep.subr.bf16.mxu0 0
        %681 = vmatpush1.bf16.msra.mxu0 %v604
        %682 = vmatprep.subr.bf16.mxu0 0
        %683 = vmatpush1.bf16.msra.mxu0 %v601
        %684 = vmatprep.subr.bf16.mxu0 0
        %685 = vmatpush1.bf16.msra.mxu0 %v598
        %686 = vmatprep.subr.bf16.mxu0 0
        %687 = vmatpush1.bf16.msra.mxu0 %v595
        %688 = vmatprep.subr.bf16.mxu0 0
        %689 = vmatpush1.bf16.msra.mxu0 %v592
        %690 = vmatprep.subr.bf16.mxu0 0
        %691 = vmatpush1.bf16.msra.mxu0 %v589
        %692 = vmatprep.subr.bf16.mxu0 0
        %693 = vmatpush2.bf16.msra.mxu0 0
        %694 = vmatprep.subr.bf16.mxu0 0
        %695 = vmatpush2.bf16.msra.mxu0 0
        %696 = vmatprep.subr.bf16.mxu0 0
        %697 = vmatpush2.bf16.msra.mxu0 0
        %698 = vmatprep.subr.bf16.mxu0 0
        %699 = vmatpush2.bf16.msra.mxu0 0
        %700 = vmatprep.subr.bf16.mxu0 0
        %701 = vmatpush2.bf16.msra.mxu0 0
        %702 = vmatprep.subr.bf16.mxu0 0
        %703 = vmatpush2.bf16.msra.mxu0 0
        %704 = vmatprep.subr.bf16.mxu0 0
        %705 = vmatpush2.bf16.msra.mxu0 0
        %706 = vmatprep.subr.bf16.mxu0 0
        %707 = vmatpush2.bf16.msra.mxu0 0
        %708 = vmatprep.mubr.bf16.mxu0 0
        %709 = vmatmul.mubr.bf16.gmra.mxu0 %v474
        %v710 = vpop.f32.mrf.mxu0
        %v711 = vadd.f32 0.0, %v710
        %v712 = vpop.f32.mrf.mxu0
        %v713 = vpop.f32.mrf.mxu0
        %v714 = vpop.f32.mrf.mxu0
        %715 = vdwg.mxu0
        %v716 = vlaneseq
        %v717 = vshrl.u32 %v716, 7
        %v718 = vsub.s32 0, %v717
        %v719 = vrot.slane %v437, %v718
        %v720 = vmul.f32 %v670, %v719
        %721 = vrot.lane.b32.xlu0 %v670, 64
        %v722 = vpop.permute.xlu0 %721
        %v723 = vlaneseq
        %v724 = vshrl.u32 %v723, 7
        %v725 = vsub.s32 0, %v724
        %v726 = vrot.slane %v438, %v725
        %v727 = vmul.f32 %v722, %v726
        %v728 = vadd.f32 %v720, %v727
        %v729 = vmul.f32 %v672, %v719
        %730 = vrot.lane.b32.xlu0 %v672, 64
        %v731 = vpop.permute.xlu0 %730
        %v732 = vmul.f32 %v731, %v726
        %v733 = vadd.f32 %v729, %v732
        %v734 = vpack.c.bf16 %v733, %v733
        %v735 = vpack.c.bf16 %v711, %v711
        %v738 = vcombine.low %v734, %v735
        %v740 = vunpack.c.l.s4 1966171168
        %v741 = vunpack.c.0.s8 %v740
        %v742 = vlaneseq
        %v743 = vshrl.u32 %v742, 7
        %v744 = vsub.s32 %v741, %v743
        %v745 = vrot.slane %v738, %v744
        %v747 = vunpack.c.l.s4 1966171168
        %v748 = vunpack.c.0.s8 %v747
        %v749 = vlaneseq
        %v750 = vshrl.u32 %v749, 7
        %v751 = vsub.s32 %v748, %v750
        %v752 = vrot.slane %v745, %v751
        %754 = vst [vmem:[%s427] sm:$0x3] %v752
        %v755 = vlaneseq
        %v756 = vshrl.u32 %v755, 7
        %v757 = vadd.s32 %v756, 8
        %v758 = vstv %s429
        %vm759 = vcmp.eq.s32.totalorder %v756, %v758
        %vm760 = vcmp.eq.s32.totalorder %v757, %v758
        %vm761 = vcmp.le.s32.totalorder %v756, %v758
        %vm762 = vcmp.le.s32.totalorder %v757, %v758
        %v763 = vld [vmem:[%s423] sm:$0xf]
        %v764 = vld [vmem:[%s423 + $0x8] sm:$0xf]
        %v765 = vld [vmem:[%s423 + $0x10] sm:$0xf]
        %v766 = vld [vmem:[%s423 + $0x18] sm:$0xf]
        %v767 = vunpack.c.l.bf16 %v763
        %v768 = vunpack.c.l.bf16 %v764
        %v769 = vunpack.c.l.bf16 %v765
        %v770 = vunpack.c.l.bf16 %v766
        %v771 = vld [vmem:[%s423 + $0x4] sm:$0xf]
        %v772 = vld [vmem:[%s423 + $0xc] sm:$0xf]
        %v773 = vld [vmem:[%s423 + $0x14] sm:$0xf]
        %v774 = vld [vmem:[%s423 + $0x1c] sm:$0xf]
        %v775 = vunpack.c.l.bf16 %v771
        %v776 = vunpack.c.l.bf16 %v772
        %v777 = vunpack.c.l.bf16 %v773
        %v778 = vunpack.c.l.bf16 %v774
        %v781 = vunpack.c.l.s4 1966171168
        %v782 = vunpack.c.0.s8 %v781
        %v783 = vlaneseq
        %v784 = vshrl.u32 %v783, 7
        %v785 = vsub.s32 %v782, %v784
        %v786 = vrot.slane %v733, %v785
        %v787 = vcombine.high %v786, %v786
        %v789 = vunpack.c.l.s4 1966171168
        %v790 = vunpack.c.0.s8 %v789
        %v791 = vlaneseq
        %v792 = vshrl.u32 %v791, 7
        %v793 = vsub.s32 %v790, %v792
        %v794 = vrot.slane %v786, %v793
        %v796 = vunpack.c.l.s4 1966171168
        %v797 = vunpack.c.0.s8 %v796
        %v798 = vlaneseq
        %v799 = vshrl.u32 %v798, 7
        %v800 = vsub.s32 %v797, %v799
        %v801 = vrot.slane %v787, %v800
        %v802 = vsel %vm759, 1, 0
        %v803 = vsel %vm760, 1, 0
        %vm804 = vcmp.eq.s32.totalorder %v802, 1
        %vm805 = vcmp.eq.s32.totalorder %v803, 1
        %v806 = vlaneseq
        %v807 = vshrl.u32 %v806, 7
        %v808 = vsub.s32 0, %v807
        %v809 = vrot.slane %v794, %v808
        %v810 = vlaneseq
        %v811 = vshrl.u32 %v810, 7
        %v812 = vsub.s32 0, %v811
        %v813 = vrot.slane %v801, %v812
        %v816 = vsel %vm804, %v809, %v767
        %v817 = vsel %vm805, %v809, %v768
        %v818 = vsel %vm804, %v813, %v769
        %v819 = vsel %vm805, %v813, %v770
        %v822 = vunpack.c.l.s4 1966171168
        %v823 = vunpack.c.0.s8 %v822
        %v824 = vlaneseq
        %v825 = vshrl.u32 %v824, 7
        %v826 = vsub.s32 %v823, %v825
        %v827 = vrot.slane %v711, %v826
        %v828 = vcombine.high %v827, %v827
        %v830 = vunpack.c.l.s4 1966171168
        %v831 = vunpack.c.0.s8 %v830
        %v832 = vlaneseq
        %v833 = vshrl.u32 %v832, 7
        %v834 = vsub.s32 %v831, %v833
        %v835 = vrot.slane %v827, %v834
        %v837 = vunpack.c.l.s4 1966171168
        %v838 = vunpack.c.0.s8 %v837
        %v839 = vlaneseq
        %v840 = vshrl.u32 %v839, 7
        %v841 = vsub.s32 %v838, %v840
        %v842 = vrot.slane %v828, %v841
        %v843 = vlaneseq
        %v844 = vshrl.u32 %v843, 7
        %v845 = vsub.s32 0, %v844
        %v846 = vrot.slane %v835, %v845
        %v847 = vlaneseq
        %v848 = vshrl.u32 %v847, 7
        %v849 = vsub.s32 0, %v848
        %v850 = vrot.slane %v842, %v849
        %v853 = vsel %vm804, %v846, %v775
        %v854 = vsel %vm805, %v846, %v776
        %v855 = vsel %vm804, %v850, %v777
        %v856 = vsel %vm805, %v850, %v778
        %v859 = vunpack.c.l.s4 1966171168
        %v860 = vunpack.c.0.s8 %v859
        %v861 = vlaneseq
        %v862 = vshrl.u32 %v861, 7
        %v863 = vsub.s32 %v860, %v862
        %v864 = vrot.slane %v728, %v863
        %v865 = vcombine.high %v864, %v864
        %v867 = vunpack.c.l.s4 1966171168
        %v868 = vunpack.c.0.s8 %v867
        %v869 = vlaneseq
        %v870 = vshrl.u32 %v869, 7
        %v871 = vsub.s32 %v868, %v870
        %v872 = vrot.slane %v864, %v871
        %v874 = vunpack.c.l.s4 1966171168
        %v875 = vunpack.c.0.s8 %v874
        %v876 = vlaneseq
        %v877 = vshrl.u32 %v876, 7
        %v878 = vsub.s32 %v875, %v877
        %v879 = vrot.slane %v865, %v878
        %v880 = vlaneseq
        %v881 = vshrl.u32 %v880, 7
        %v882 = vsub.s32 0, %v881
        %v883 = vrot.slane %v872, %v882
        %v884 = vlaneseq
        %v885 = vshrl.u32 %v884, 7
        %v886 = vsub.s32 0, %v885
        %v887 = vrot.slane %v879, %v886
        %v890 = vmul.f32 %v816, %v883
        %v891 = vmul.f32 %v817, %v883
        %v892 = vmul.f32 %v818, %v887
        %v893 = vmul.f32 %v819, %v887
        %894 = vmatprep.subr.mxu0 0.0
        %895 = vmatpush1.msra.mxu0 %v456
        %896 = vmatprep.subr.mxu0 0.0
        %897 = vmatpush1.msra.mxu0 %v455
        %898 = vmatprep.subr.mxu0 0.0
        %899 = vmatpush1.msra.mxu0 %v454
        %900 = vmatprep.subr.mxu0 0.0
        %901 = vmatpush1.msra.mxu0 %v453
        %902 = vmatprep.subr.mxu0 0.0
        %903 = vmatpush1.msra.mxu0 %v452
        %904 = vmatprep.subr.mxu0 0.0
        %905 = vmatpush1.msra.mxu0 %v451
        %906 = vmatprep.subr.mxu0 0.0
        %907 = vmatpush1.msra.mxu0 %v450
        %908 = vmatprep.subr.mxu0 0.0
        %909 = vmatpush1.msra.mxu0 %v449
        %910 = vmatprep.subr.mxu0 0.0
        %911 = vmatpush1.msra.mxu0 %v448
        %912 = vmatprep.subr.mxu0 0.0
        %913 = vmatpush1.msra.mxu0 %v447
        %914 = vmatprep.subr.mxu0 0.0
        %915 = vmatpush1.msra.mxu0 %v446
        %916 = vmatprep.subr.mxu0 0.0
        %917 = vmatpush1.msra.mxu0 %v445
        %918 = vmatprep.subr.mxu0 0.0
        %919 = vmatpush1.msra.mxu0 %v444
        %920 = vmatprep.subr.mxu0 0.0
        %921 = vmatpush1.msra.mxu0 %v443
        %922 = vmatprep.subr.mxu0 0.0
        %923 = vmatpush1.msra.mxu0 %v442
        %924 = vmatprep.subr.mxu0 0.0
        %925 = vmatpush1.msra.mxu0 %v441
        %926 = vmatprep.subr.mxu0 0.0
        %927 = vmatpush2.msra.mxu0 0.0
        %928 = vmatprep.subr.mxu0 0.0
        %929 = vmatpush2.msra.mxu0 0.0
        %930 = vmatprep.subr.mxu0 0.0
        %931 = vmatpush2.msra.mxu0 0.0
        %932 = vmatprep.subr.mxu0 0.0
        %933 = vmatpush2.msra.mxu0 0.0
        %934 = vmatprep.subr.mxu0 0.0
        %935 = vmatpush2.msra.mxu0 0.0
        %936 = vmatprep.subr.mxu0 0.0
        %937 = vmatpush2.msra.mxu0 0.0
        %938 = vmatprep.subr.mxu0 0.0
        %939 = vmatpush2.msra.mxu0 0.0
        %940 = vmatprep.subr.mxu0 0.0
        %941 = vmatpush2.msra.mxu0 0.0
        %942 = vmatprep.subr.mxu0 0.0
        %943 = vmatpush2.msra.mxu0 0.0
        %944 = vmatprep.subr.mxu0 0.0
        %945 = vmatpush2.msra.mxu0 0.0
        %946 = vmatprep.subr.mxu0 0.0
        %947 = vmatpush2.msra.mxu0 0.0
        %948 = vmatprep.subr.mxu0 0.0
        %949 = vmatpush2.msra.mxu0 0.0
        %950 = vmatprep.subr.mxu0 0.0
        %951 = vmatpush2.msra.mxu0 0.0
        %952 = vmatprep.subr.mxu0 0.0
        %953 = vmatpush2.msra.mxu0 0.0
        %954 = vmatprep.subr.mxu0 0.0
        %955 = vmatpush2.msra.mxu0 0.0
        %956 = vmatprep.subr.mxu0 0.0
        %957 = vmatpush2.msra.mxu0 0.0
        %958 = vmatprep.mubr.f32.mxu0 0.0
        %959 = vmatmul.mubr.f32.gmra.mxu0 %v890
        %v960 = vpop.f32.mrf.mxu0
        %v961 = vadd.f32 0.0, %v960
        %v962 = vpop.f32.mrf.mxu0
        %963 = vmatprep.mubr.f32.mxu0 0.0
        %964 = vmatmul.mubr.f32.gmra.mxu0 %v891
        %v965 = vpop.f32.mrf.mxu0
        %v966 = vadd.f32 0.0, %v965
        %v967 = vpop.f32.mrf.mxu0
        %968 = vmatprep.mubr.f32.mxu0 0.0
        %969 = vmatmul.mubr.f32.gmra.mxu0 %v892
        %v970 = vpop.f32.mrf.mxu0
        %v971 = vadd.f32 0.0, %v970
        %v972 = vpop.f32.mrf.mxu0
        %973 = vmatprep.mubr.f32.mxu0 0.0
        %974 = vmatmul.mubr.f32.gmra.mxu0 %v893
        %v975 = vpop.f32.mrf.mxu0
        %v976 = vadd.f32 0.0, %v975
        %v977 = vpop.f32.mrf.mxu0
        %978 = vdwg.mxu0
        %v979 = vmul.f32 %v961, 0.17677669
        %v980 = vmul.f32 %v966, 0.17677669
        %v981 = vmul.f32 %v971, 0.17677669
        %v982 = vmul.f32 %v976, 0.17677669
        %v983 = vsel %vm761, 1, 0
        %v984 = vsel %vm762, 1, 0
        %vm985 = vcmp.eq.s32.totalorder %v983, 1
        %vm986 = vcmp.eq.s32.totalorder %v984, 1
        %v987 = vsel %vm985, %v979, -1e+30
        %v988 = vsel %vm986, %v980, -1e+30
        %v989 = vsel %vm985, %v981, -1e+30
        %v990 = vsel %vm986, %v982, -1e+30
        %vm991 = vcmask 31744
        %v992 = vsel %vm991, %v987, -inf
        %v993 = vsel %vm991, %v988, -inf
        %v994 = vmax.f32 %v992, %v993
        %v995 = vrot.slane %v994, 4
        %v996 = vmax.f32 %v994, %v995
        %v997 = vrot.slane %v996, 2
        %v998 = vmax.f32 %v996, %v997
        %v999 = vrot.slane %v998, 1
        %v1000 = vmax.f32 %v998, %v999
        %v1001 = vsel %vm991, %v989, -inf
        %v1002 = vsel %vm991, %v990, -inf
        %v1003 = vmax.f32 %v1001, %v1002
        %v1004 = vrot.slane %v1003, 4
        %v1005 = vmax.f32 %v1003, %v1004
        %v1006 = vrot.slane %v1005, 2
        %v1007 = vmax.f32 %v1005, %v1006
        %v1008 = vrot.slane %v1007, 1
        %v1009 = vmax.f32 %v1007, %v1008
        %v1010 = vsub.f32 %v987, %v1000
        %v1011 = vsub.f32 %v988, %v1000
        %v1012 = vsub.f32 %v989, %v1009
        %v1013 = vsub.f32 %v990, %v1009
        %v1014 = vmul.f32 %v1010, 1.442695
        %v1015 = vpow.pop %v1014
        %v1016 = vmul.f32 %v1011, 1.442695
        %v1017 = vpow.pop %v1016
        %v1018 = vmul.f32 %v1012, 1.442695
        %v1019 = vpow.pop %v1018
        %v1020 = vmul.f32 %v1013, 1.442695
        %v1021 = vpow.pop %v1020
        %v1022 = vsel %vm991, %v1015, 0.0
        %v1023 = vsel %vm991, %v1017, 0.0
        %v1024 = vadd.f32 %v1022, %v1023
        %v1025 = vrot.slane %v1024, 4
        %v1026 = vadd.f32 %v1024, %v1025
        %v1027 = vrot.slane %v1026, 2
        %v1028 = vadd.f32 %v1026, %v1027
        %v1029 = vrot.slane %v1028, 1
        %v1030 = vadd.f32 %v1028, %v1029
        %v1031 = vsel %vm991, %v1019, 0.0
        %v1032 = vsel %vm991, %v1021, 0.0
        %v1033 = vadd.f32 %v1031, %v1032
        %v1034 = vrot.slane %v1033, 4
        %v1035 = vadd.f32 %v1033, %v1034
        %v1036 = vrot.slane %v1035, 2
        %v1037 = vadd.f32 %v1035, %v1036
        %v1038 = vrot.slane %v1037, 1
        %v1039 = vadd.f32 %v1037, %v1038
        %v1040 = vrcp.pop %v1030
        %v1041 = vrcp.pop %v1039
        %v1042 = vmul.f32 %v1015, %v1040
        %v1043 = vmul.f32 %v1017, %v1040
        %v1044 = vmul.f32 %v1019, %v1041
        %v1045 = vmul.f32 %v1021, %v1041
        %v1047 = vsel %vm991, %v1042, 0
        %v1050 = vsel %vm991, %v1043, 0
        %v1053 = vsel %vm991, %v1044, 0
        %v1056 = vsel %vm991, %v1045, 0
        %vm1058 = vcmask 1043456
        %v1060 = vsel %vm1058, %v439, 0
        %1062 = vmatprep.subr.mxu0 0.0
        %1063 = vmatpush1.msra.mxu0 0.0
        %1064 = vmatprep.subr.mxu0 0.0
        %1065 = vmatpush1.msra.mxu0 0.0
        %1066 = vmatprep.subr.mxu0 0.0
        %1067 = vmatpush1.msra.mxu0 0.0
        %1068 = vmatprep.subr.mxu0 0.0
        %1069 = vmatpush1.msra.mxu0 0.0
        %1070 = vmatprep.subr.mxu0 0.0
        %1071 = vmatpush1.msra.mxu0 0.0
        %1072 = vmatprep.subr.mxu0 0.0
        %1073 = vmatpush1.msra.mxu0 0.0
        %1074 = vmatprep.subr.mxu0 0.0
        %1075 = vmatpush1.msra.mxu0 0.0
        %1076 = vmatprep.subr.mxu0 0.0
        %1077 = vmatpush1.msra.mxu0 0.0
        %1078 = vmatprep.subr.mxu0 0.0
        %1079 = vmatpush1.msra.mxu0 0.0
        %1080 = vmatprep.subr.mxu0 0.0
        %1081 = vmatpush1.msra.mxu0 0.0
        %1082 = vmatprep.subr.mxu0 0.0
        %1083 = vmatpush1.msra.mxu0 0.0
        %1084 = vmatprep.subr.mxu0 0.0
        %1085 = vmatpush1.msra.mxu0 0.0
        %1086 = vmatprep.subr.mxu0 0.0
        %1087 = vmatpush1.msra.mxu0 0.0
        %1088 = vmatprep.subr.mxu0 0.0
        %1089 = vmatpush1.msra.mxu0 0.0
        %1090 = vmatprep.subr.mxu0 0.0
        %1091 = vmatpush1.msra.mxu0 0.0
        %1092 = vmatprep.subr.mxu0 0.0
        %1093 = vmatpush1.msra.mxu0 %v1060
        %1094 = vmatprep.subr.mxu0 0.0
        %1095 = vmatpush2.msra.mxu0 0.0
        %1096 = vmatprep.subr.mxu0 0.0
        %1097 = vmatpush2.msra.mxu0 0.0
        %1098 = vmatprep.subr.mxu0 0.0
        %1099 = vmatpush2.msra.mxu0 0.0
        %1100 = vmatprep.subr.mxu0 0.0
        %1101 = vmatpush2.msra.mxu0 0.0
        %1102 = vmatprep.subr.mxu0 0.0
        %1103 = vmatpush2.msra.mxu0 0.0
        %1104 = vmatprep.subr.mxu0 0.0
        %1105 = vmatpush2.msra.mxu0 0.0
        %1106 = vmatprep.subr.mxu0 0.0
        %1107 = vmatpush2.msra.mxu0 0.0
        %1108 = vmatprep.subr.mxu0 0.0
        %1109 = vmatpush2.msra.mxu0 0.0
        %1110 = vmatprep.subr.mxu0 0.0
        %1111 = vmatpush2.msra.mxu0 0.0
        %1112 = vmatprep.subr.mxu0 0.0
        %1113 = vmatpush2.msra.mxu0 0.0
        %1114 = vmatprep.subr.mxu0 0.0
        %1115 = vmatpush2.msra.mxu0 0.0
        %1116 = vmatprep.subr.mxu0 0.0
        %1117 = vmatpush2.msra.mxu0 0.0
        %1118 = vmatprep.subr.mxu0 0.0
        %1119 = vmatpush2.msra.mxu0 0.0
        %1120 = vmatprep.subr.mxu0 0.0
        %1121 = vmatpush2.msra.mxu0 0.0
        %1122 = vmatprep.subr.mxu0 0.0
        %1123 = vmatpush2.msra.mxu0 0.0
        %1124 = vmatprep.subr.mxu0 0.0
        %1125 = vmatpush2.msra.mxu0 0.0
        %1126 = vmatprep.mubr.f32.mxu0 0.0
        %1127 = vmatmul.mubr.f32.gmra.mxu0 %v1047
        %v1128 = vpop.f32.mrf.mxu0
        %v1129 = vadd.f32 0.0, %v1128
        %v1130 = vpop.f32.mrf.mxu0
        %1131 = vmatprep.mubr.f32.mxu0 0.0
        %1132 = vmatmul.mubr.f32.gmra.mxu0 %v1050
        %v1133 = vpop.f32.mrf.mxu0
        %v1134 = vadd.f32 0.0, %v1133
        %v1135 = vpop.f32.mrf.mxu0
        %1136 = vmatprep.mubr.f32.mxu0 0.0
        %1137 = vmatmul.mubr.f32.gmra.mxu0 %v1053
        %v1138 = vpop.f32.mrf.mxu0
        %v1139 = vadd.f32 0.0, %v1138
        %v1140 = vpop.f32.mrf.mxu0
        %1141 = vmatprep.mubr.f32.mxu0 0.0
        %1142 = vmatmul.mubr.f32.gmra.mxu0 %v1056
        %v1143 = vpop.f32.mrf.mxu0
        %v1144 = vadd.f32 0.0, %v1143
        %v1145 = vpop.f32.mrf.mxu0
        %1146 = vdwg.mxu0
        %v1147 = vmul.f32 %v1129, %v853
        %v1148 = vmul.f32 %v1134, %v854
        %v1149 = vmul.f32 %v1139, %v855
        %v1150 = vmul.f32 %v1144, %v856
        %v1151 = vadd.f32 %v1147, %v1148
        %v1152 = vrot.slane %v1151, 4
        %v1153 = vadd.f32 %v1151, %v1152
        %v1154 = vrot.slane %v1153, 2
        %v1155 = vadd.f32 %v1153, %v1154
        %v1156 = vrot.slane %v1155, 1
        %v1157 = vadd.f32 %v1155, %v1156
        %v1158 = vadd.f32 %v1149, %v1150
        %v1159 = vrot.slane %v1158, 4
        %v1160 = vadd.f32 %v1158, %v1159
        %v1161 = vrot.slane %v1160, 2
        %v1162 = vadd.f32 %v1160, %v1161
        %v1163 = vrot.slane %v1162, 1
        %v1164 = vadd.f32 %v1162, %v1163
        %v1165 = vpack.c.bf16 %v1157, %v1157
        %v1166 = vpack.c.bf16 %v1164, %v1164
        %v1167 = vld [vmem:[%s358 + $0xc] sm:$0xf]
        %v1168 = vld [vmem:[%s358 + $0x3c] sm:$0xf]
        %v1169 = vld [vmem:[%s358 + $0x6c] sm:$0xf]
        %v1170 = vld [vmem:[%s358 + $0x9c] sm:$0xf]
        %v1171 = vld [vmem:[%s358 + $0xcc] sm:$0xf]
        %v1172 = vld [vmem:[%s358 + $0xfc] sm:$0xf]
        %v1173 = vld [vmem:[%s358 + $0x12c] sm:$0xf]
        %v1174 = vld [vmem:[%s358 + $0x15c] sm:$0xf]
        %v1175 = vld [vmem:[%s358 + $0x18c] sm:$0xf]
        %v1176 = vld [vmem:[%s358 + $0x1bc] sm:$0xf]
        %v1177 = vld [vmem:[%s358 + $0x1ec] sm:$0xf]
        %v1178 = vld [vmem:[%s358 + $0x21c] sm:$0xf]
        %v1179 = vld [vmem:[%s358 + $0x24c] sm:$0xf]
        %v1180 = vld [vmem:[%s358 + $0x27c] sm:$0xf]
        %v1181 = vld [vmem:[%s358 + $0x2ac] sm:$0xf]
        %v1182 = vld [vmem:[%s358 + $0x2dc] sm:$0xf]
        %v1185 = vunpack.c.l.b16 %v1165
        %v1186 = vunpack.c.l.b16 %v1166
        %vm1187 = vcmask 1041409
        %v1188 = vsel %vm1187, %v1186, %v1185
        %v1189 = vpack.c.b16 %v1188, %v1188
        %v1207 = vunpack.c.l.b16 %v1167
        %v1208 = vunpack.c.l.b16 %v1168
        %v1209 = vunpack.c.l.b16 %v1169
        %v1210 = vunpack.c.l.b16 %v1170
        %v1211 = vunpack.c.l.b16 %v1171
        %v1212 = vunpack.c.l.b16 %v1172
        %v1213 = vunpack.c.l.b16 %v1173
        %v1214 = vunpack.c.l.b16 %v1174
        %v1215 = vunpack.c.l.b16 %v1175
        %v1216 = vunpack.c.l.b16 %v1176
        %v1217 = vunpack.c.l.b16 %v1177
        %v1218 = vunpack.c.l.b16 %v1178
        %v1219 = vunpack.c.l.b16 %v1179
        %v1220 = vunpack.c.l.b16 %v1180
        %v1221 = vunpack.c.l.b16 %v1181
        %v1222 = vunpack.c.l.b16 %v1182
        %v1223 = vpack.c.b16 %v1208, %v1207
        %v1224 = vpack.c.b16 %v1210, %v1209
        %v1225 = vpack.c.b16 %v1212, %v1211
        %v1226 = vpack.c.b16 %v1214, %v1213
        %v1227 = vpack.c.b16 %v1216, %v1215
        %v1228 = vpack.c.b16 %v1218, %v1217
        %v1229 = vpack.c.b16 %v1220, %v1219
        %v1230 = vpack.c.b16 %v1222, %v1221
        %1239 = vmatprep.subr.bf16.mxu0 0
        %1240 = vmatpush1.bf16.msra.mxu0 %v1230
        %1241 = vmatprep.subr.bf16.mxu0 0
        %1242 = vmatpush1.bf16.msra.mxu0 %v1229
        %1243 = vmatprep.subr.bf16.mxu0 0
        %1244 = vmatpush1.bf16.msra.mxu0 %v1228
        %1245 = vmatprep.subr.bf16.mxu0 0
        %1246 = vmatpush1.bf16.msra.mxu0 %v1227
        %1247 = vmatprep.subr.bf16.mxu0 0
        %1248 = vmatpush1.bf16.msra.mxu0 %v1226
        %1249 = vmatprep.subr.bf16.mxu0 0
        %1250 = vmatpush1.bf16.msra.mxu0 %v1225
        %1251 = vmatprep.subr.bf16.mxu0 0
        %1252 = vmatpush1.bf16.msra.mxu0 %v1224
        %1253 = vmatprep.subr.bf16.mxu0 0
        %1254 = vmatpush1.bf16.msra.mxu0 %v1223
        %1255 = vmatprep.subr.bf16.mxu0 0
        %1256 = vmatpush2.bf16.msra.mxu0 0
        %1257 = vmatprep.subr.bf16.mxu0 0
        %1258 = vmatpush2.bf16.msra.mxu0 0
        %1259 = vmatprep.subr.bf16.mxu0 0
        %1260 = vmatpush2.bf16.msra.mxu0 0
        %1261 = vmatprep.subr.bf16.mxu0 0
        %1262 = vmatpush2.bf16.msra.mxu0 0
        %1263 = vmatprep.subr.bf16.mxu0 0
        %1264 = vmatpush2.bf16.msra.mxu0 0
        %1265 = vmatprep.subr.bf16.mxu0 0
        %1266 = vmatpush2.bf16.msra.mxu0 0
        %1267 = vmatprep.subr.bf16.mxu0 0
        %1268 = vmatpush2.bf16.msra.mxu0 0
        %1269 = vmatprep.subr.bf16.mxu0 0
        %1270 = vmatpush2.bf16.msra.mxu0 0
        %1271 = vmatprep.mubr.bf16.mxu0 0
        %1272 = vmatmul.mubr.bf16.gmra.mxu0 %v1189
        %v1273 = vpop.f32.mrf.mxu0
        %v1274 = vadd.f32 0.0, %v1273
        %v1275 = vpop.f32.mrf.mxu0
        %v1276 = vpop.f32.mrf.mxu0
        %v1277 = vpop.f32.mrf.mxu0
        %1278 = vdwg.mxu0
        %v1279 = vadd.f32 %v436, %v1274
        %v1280 = vmul.f32 %v1279, %v1279
        %v1281 = vsel %vm460, %v1280, 0.0
        %1282 = vadd.xlane.f32.xlu0 %v1281
        %v1283 = vpop.xlane.xlu0 %1282
        %v1284 = vmul.f32 %v1283, %v464
        %v1285 = vadd.f32 %v1284, 1e-05
        %v1286 = vrsqrt.pop %v1285
        %v1287 = vmul.f32 %v1279, %v1286
        %v1288 = vlaneseq
        %v1289 = vshrl.u32 %v1288, 7
        %v1290 = vsub.s32 0, %v1289
        %v1291 = vrot.slane %v458, %v1290
        %v1292 = vmul.f32 %v1287, %v1291
        %v1293 = vpack.c.bf16 %v1292, %v1292
        %v1294 = vld [vmem:[%s358 + $0x10] sm:$0xff]
        %v1295 = vld [vmem:[%s358 + $0x18] sm:$0xff]
        %v1296 = vld [vmem:[%s358 + $0x20] sm:$0xff]
        %v1297 = vld [vmem:[%s358 + $0x28] sm:$0xff]
        %v1298 = vld [vmem:[%s358 + $0x40] sm:$0xff]
        %v1299 = vld [vmem:[%s358 + $0x48] sm:$0xff]
        %v1300 = vld [vmem:[%s358 + $0x50] sm:$0xff]
        %v1301 = vld [vmem:[%s358 + $0x58] sm:$0xff]
        %v1302 = vld [vmem:[%s358 + $0x70] sm:$0xff]
        %v1303 = vld [vmem:[%s358 + $0x78] sm:$0xff]
        %v1304 = vld [vmem:[%s358 + $0x80] sm:$0xff]
        %v1305 = vld [vmem:[%s358 + $0x88] sm:$0xff]
        %v1306 = vld [vmem:[%s358 + $0xa0] sm:$0xff]
        %v1307 = vld [vmem:[%s358 + $0xa8] sm:$0xff]
        %v1308 = vld [vmem:[%s358 + $0xb0] sm:$0xff]
        %v1309 = vld [vmem:[%s358 + $0xb8] sm:$0xff]
        %v1310 = vld [vmem:[%s358 + $0xd0] sm:$0xff]
        %v1311 = vld [vmem:[%s358 + $0xd8] sm:$0xff]
        %v1312 = vld [vmem:[%s358 + $0xe0] sm:$0xff]
        %v1313 = vld [vmem:[%s358 + $0xe8] sm:$0xff]
        %v1314 = vld [vmem:[%s358 + $0x100] sm:$0xff]
        %v1315 = vld [vmem:[%s358 + $0x108] sm:$0xff]
        %v1316 = vld [vmem:[%s358 + $0x110] sm:$0xff]
        %v1317 = vld [vmem:[%s358 + $0x118] sm:$0xff]
        %v1318 = vld [vmem:[%s358 + $0x130] sm:$0xff]
        %v1319 = vld [vmem:[%s358 + $0x138] sm:$0xff]
        %v1320 = vld [vmem:[%s358 + $0x140] sm:$0xff]
        %v1321 = vld [vmem:[%s358 + $0x148] sm:$0xff]
        %v1322 = vld [vmem:[%s358 + $0x160] sm:$0xff]
        %v1323 = vld [vmem:[%s358 + $0x168] sm:$0xff]
        %v1324 = vld [vmem:[%s358 + $0x170] sm:$0xff]
        %v1325 = vld [vmem:[%s358 + $0x178] sm:$0xff]
        %v1326 = vld [vmem:[%s358 + $0x190] sm:$0xff]
        %v1327 = vld [vmem:[%s358 + $0x198] sm:$0xff]
        %v1328 = vld [vmem:[%s358 + $0x1a0] sm:$0xff]
        %v1329 = vld [vmem:[%s358 + $0x1a8] sm:$0xff]
        %v1330 = vld [vmem:[%s358 + $0x1c0] sm:$0xff]
        %v1331 = vld [vmem:[%s358 + $0x1c8] sm:$0xff]
        %v1332 = vld [vmem:[%s358 + $0x1d0] sm:$0xff]
        %v1333 = vld [vmem:[%s358 + $0x1d8] sm:$0xff]
        %v1334 = vld [vmem:[%s358 + $0x1f0] sm:$0xff]
        %v1335 = vld [vmem:[%s358 + $0x1f8] sm:$0xff]
        %v1336 = vld [vmem:[%s358 + $0x200] sm:$0xff]
        %v1337 = vld [vmem:[%s358 + $0x208] sm:$0xff]
        %v1338 = vld [vmem:[%s358 + $0x220] sm:$0xff]
        %v1339 = vld [vmem:[%s358 + $0x228] sm:$0xff]
        %v1340 = vld [vmem:[%s358 + $0x230] sm:$0xff]
        %v1341 = vld [vmem:[%s358 + $0x238] sm:$0xff]
        %v1342 = vld [vmem:[%s358 + $0x250] sm:$0xff]
        %v1343 = vld [vmem:[%s358 + $0x258] sm:$0xff]
        %v1344 = vld [vmem:[%s358 + $0x260] sm:$0xff]
        %v1345 = vld [vmem:[%s358 + $0x268] sm:$0xff]
        %v1346 = vld [vmem:[%s358 + $0x280] sm:$0xff]
        %v1347 = vld [vmem:[%s358 + $0x288] sm:$0xff]
        %v1348 = vld [vmem:[%s358 + $0x290] sm:$0xff]
        %v1349 = vld [vmem:[%s358 + $0x298] sm:$0xff]
        %v1350 = vld [vmem:[%s358 + $0x2b0] sm:$0xff]
        %v1351 = vld [vmem:[%s358 + $0x2b8] sm:$0xff]
        %v1352 = vld [vmem:[%s358 + $0x2c0] sm:$0xff]
        %v1353 = vld [vmem:[%s358 + $0x2c8] sm:$0xff]
        %v1354 = vld [vmem:[%s358 + $0x2e0] sm:$0xff]
        %v1355 = vld [vmem:[%s358 + $0x2e8] sm:$0xff]
        %v1356 = vld [vmem:[%s358 + $0x2f0] sm:$0xff]
        %v1357 = vld [vmem:[%s358 + $0x2f8] sm:$0xff]
        %v1422 = vunpack.c.l.b16 %v1294
        %v1423 = vunpack.c.h.b16 %v1294
        %v1424 = vunpack.c.l.b16 %v1295
        %v1425 = vunpack.c.h.b16 %v1295
        %v1426 = vunpack.c.l.b16 %v1296
        %v1427 = vunpack.c.h.b16 %v1296
        %v1428 = vunpack.c.l.b16 %v1297
        %v1429 = vunpack.c.h.b16 %v1297
        %v1430 = vunpack.c.l.b16 %v1298
        %v1431 = vunpack.c.h.b16 %v1298
        %v1432 = vunpack.c.l.b16 %v1299
        %v1433 = vunpack.c.h.b16 %v1299
        %v1434 = vunpack.c.l.b16 %v1300
        %v1435 = vunpack.c.h.b16 %v1300
        %v1436 = vunpack.c.l.b16 %v1301
        %v1437 = vunpack.c.h.b16 %v1301
        %v1438 = vunpack.c.l.b16 %v1302
        %v1439 = vunpack.c.h.b16 %v1302
        %v1440 = vunpack.c.l.b16 %v1303
        %v1441 = vunpack.c.h.b16 %v1303
        %v1442 = vunpack.c.l.b16 %v1304
        %v1443 = vunpack.c.h.b16 %v1304
        %v1444 = vunpack.c.l.b16 %v1305
        %v1445 = vunpack.c.h.b16 %v1305
        %v1446 = vunpack.c.l.b16 %v1306
        %v1447 = vunpack.c.h.b16 %v1306
        %v1448 = vunpack.c.l.b16 %v1307
        %v1449 = vunpack.c.h.b16 %v1307
        %v1450 = vunpack.c.l.b16 %v1308
        %v1451 = vunpack.c.h.b16 %v1308
        %v1452 = vunpack.c.l.b16 %v1309
        %v1453 = vunpack.c.h.b16 %v1309
        %v1454 = vunpack.c.l.b16 %v1310
        %v1455 = vunpack.c.h.b16 %v1310
        %v1456 = vunpack.c.l.b16 %v1311
        %v1457 = vunpack.c.h.b16 %v1311
        %v1458 = vunpack.c.l.b16 %v1312
        %v1459 = vunpack.c.h.b16 %v1312
        %v1460 = vunpack.c.l.b16 %v1313
        %v1461 = vunpack.c.h.b16 %v1313
        %v1462 = vunpack.c.l.b16 %v1314
        %v1463 = vunpack.c.h.b16 %v1314
        %v1464 = vunpack.c.l.b16 %v1315
        %v1465 = vunpack.c.h.b16 %v1315
        %v1466 = vunpack.c.l.b16 %v1316
        %v1467 = vunpack.c.h.b16 %v1316
        %v1468 = vunpack.c.l.b16 %v1317
        %v1469 = vunpack.c.h.b16 %v1317
        %v1470 = vunpack.c.l.b16 %v1318
        %v1471 = vunpack.c.h.b16 %v1318
        %v1472 = vunpack.c.l.b16 %v1319
        %v1473 = vunpack.c.h.b16 %v1319
        %v1474 = vunpack.c.l.b16 %v1320
        %v1475 = vunpack.c.h.b16 %v1320
        %v1476 = vunpack.c.l.b16 %v1321
        %v1477 = vunpack.c.h.b16 %v1321
        %v1478 = vunpack.c.l.b16 %v1322
        %v1479 = vunpack.c.h.b16 %v1322
        %v1480 = vunpack.c.l.b16 %v1323
        %v1481 = vunpack.c.h.b16 %v1323
        %v1482 = vunpack.c.l.b16 %v1324
        %v1483 = vunpack.c.h.b16 %v1324
        %v1484 = vunpack.c.l.b16 %v1325
        %v1485 = vunpack.c.h.b16 %v1325
        %v1486 = vunpack.c.l.b16 %v1326
        %v1487 = vunpack.c.h.b16 %v1326
        %v1488 = vunpack.c.l.b16 %v1327
        %v1489 = vunpack.c.h.b16 %v1327
        %v1490 = vunpack.c.l.b16 %v1328
        %v1491 = vunpack.c.h.b16 %v1328
        %v1492 = vunpack.c.l.b16 %v1329
        %v1493 = vunpack.c.h.b16 %v1329
        %v1494 = vunpack.c.l.b16 %v1330
        %v1495 = vunpack.c.h.b16 %v1330
        %v1496 = vunpack.c.l.b16 %v1331
        %v1497 = vunpack.c.h.b16 %v1331
        %v1498 = vunpack.c.l.b16 %v1332
        %v1499 = vunpack.c.h.b16 %v1332
        %v1500 = vunpack.c.l.b16 %v1333
        %v1501 = vunpack.c.h.b16 %v1333
        %v1502 = vunpack.c.l.b16 %v1334
        %v1503 = vunpack.c.h.b16 %v1334
        %v1504 = vunpack.c.l.b16 %v1335
        %v1505 = vunpack.c.h.b16 %v1335
        %v1506 = vunpack.c.l.b16 %v1336
        %v1507 = vunpack.c.h.b16 %v1336
        %v1508 = vunpack.c.l.b16 %v1337
        %v1509 = vunpack.c.h.b16 %v1337
        %v1510 = vunpack.c.l.b16 %v1338
        %v1511 = vunpack.c.h.b16 %v1338
        %v1512 = vunpack.c.l.b16 %v1339
        %v1513 = vunpack.c.h.b16 %v1339
        %v1514 = vunpack.c.l.b16 %v1340
        %v1515 = vunpack.c.h.b16 %v1340
        %v1516 = vunpack.c.l.b16 %v1341
        %v1517 = vunpack.c.h.b16 %v1341
        %v1518 = vunpack.c.l.b16 %v1342
        %v1519 = vunpack.c.h.b16 %v1342
        %v1520 = vunpack.c.l.b16 %v1343
        %v1521 = vunpack.c.h.b16 %v1343
        %v1522 = vunpack.c.l.b16 %v1344
        %v1523 = vunpack.c.h.b16 %v1344
        %v1524 = vunpack.c.l.b16 %v1345
        %v1525 = vunpack.c.h.b16 %v1345
        %v1526 = vunpack.c.l.b16 %v1346
        %v1527 = vunpack.c.h.b16 %v1346
        %v1528 = vunpack.c.l.b16 %v1347
        %v1529 = vunpack.c.h.b16 %v1347
        %v1530 = vunpack.c.l.b16 %v1348
        %v1531 = vunpack.c.h.b16 %v1348
        %v1532 = vunpack.c.l.b16 %v1349
        %v1533 = vunpack.c.h.b16 %v1349
        %v1534 = vunpack.c.l.b16 %v1350
        %v1535 = vunpack.c.h.b16 %v1350
        %v1536 = vunpack.c.l.b16 %v1351
        %v1537 = vunpack.c.h.b16 %v1351
        %v1538 = vunpack.c.l.b16 %v1352
        %v1539 = vunpack.c.h.b16 %v1352
        %v1540 = vunpack.c.l.b16 %v1353
        %v1541 = vunpack.c.h.b16 %v1353
        %v1542 = vunpack.c.l.b16 %v1354
        %v1543 = vunpack.c.h.b16 %v1354
        %v1544 = vunpack.c.l.b16 %v1355
        %v1545 = vunpack.c.h.b16 %v1355
        %v1546 = vunpack.c.l.b16 %v1356
        %v1547 = vunpack.c.h.b16 %v1356
        %v1548 = vunpack.c.l.b16 %v1357
        %v1549 = vunpack.c.h.b16 %v1357
        %v1550 = vpack.c.b16 %v1430, %v1422
        %v1551 = vpack.c.b16 %v1431, %v1423
        %v1552 = vpack.c.b16 %v1432, %v1424
        %v1553 = vpack.c.b16 %v1433, %v1425
        %v1554 = vpack.c.b16 %v1434, %v1426
        %v1555 = vpack.c.b16 %v1435, %v1427
        %v1556 = vpack.c.b16 %v1436, %v1428
        %v1557 = vpack.c.b16 %v1437, %v1429
        %v1558 = vpack.c.b16 %v1446, %v1438
        %v1559 = vpack.c.b16 %v1447, %v1439
        %v1560 = vpack.c.b16 %v1448, %v1440
        %v1561 = vpack.c.b16 %v1449, %v1441
        %v1562 = vpack.c.b16 %v1450, %v1442
        %v1563 = vpack.c.b16 %v1451, %v1443
        %v1564 = vpack.c.b16 %v1452, %v1444
        %v1565 = vpack.c.b16 %v1453, %v1445
        %v1566 = vpack.c.b16 %v1462, %v1454
        %v1567 = vpack.c.b16 %v1463, %v1455
        %v1568 = vpack.c.b16 %v1464, %v1456
        %v1569 = vpack.c.b16 %v1465, %v1457
        %v1570 = vpack.c.b16 %v1466, %v1458
        %v1571 = vpack.c.b16 %v1467, %v1459
        %v1572 = vpack.c.b16 %v1468, %v1460
        %v1573 = vpack.c.b16 %v1469, %v1461
        %v1574 = vpack.c.b16 %v1478, %v1470
        %v1575 = vpack.c.b16 %v1479, %v1471
        %v1576 = vpack.c.b16 %v1480, %v1472
        %v1577 = vpack.c.b16 %v1481, %v1473
        %v1578 = vpack.c.b16 %v1482, %v1474
        %v1579 = vpack.c.b16 %v1483, %v1475
        %v1580 = vpack.c.b16 %v1484, %v1476
        %v1581 = vpack.c.b16 %v1485, %v1477
        %v1582 = vpack.c.b16 %v1494, %v1486
        %v1583 = vpack.c.b16 %v1495, %v1487
        %v1584 = vpack.c.b16 %v1496, %v1488
        %v1585 = vpack.c.b16 %v1497, %v1489
        %v1586 = vpack.c.b16 %v1498, %v1490
        %v1587 = vpack.c.b16 %v1499, %v1491
        %v1588 = vpack.c.b16 %v1500, %v1492
        %v1589 = vpack.c.b16 %v1501, %v1493
        %v1590 = vpack.c.b16 %v1510, %v1502
        %v1591 = vpack.c.b16 %v1511, %v1503
        %v1592 = vpack.c.b16 %v1512, %v1504
        %v1593 = vpack.c.b16 %v1513, %v1505
        %v1594 = vpack.c.b16 %v1514, %v1506
        %v1595 = vpack.c.b16 %v1515, %v1507
        %v1596 = vpack.c.b16 %v1516, %v1508
        %v1597 = vpack.c.b16 %v1517, %v1509
        %v1598 = vpack.c.b16 %v1526, %v1518
        %v1599 = vpack.c.b16 %v1527, %v1519
        %v1600 = vpack.c.b16 %v1528, %v1520
        %v1601 = vpack.c.b16 %v1529, %v1521
        %v1602 = vpack.c.b16 %v1530, %v1522
        %v1603 = vpack.c.b16 %v1531, %v1523
        %v1604 = vpack.c.b16 %v1532, %v1524
        %v1605 = vpack.c.b16 %v1533, %v1525
        %v1606 = vpack.c.b16 %v1542, %v1534
        %v1607 = vpack.c.b16 %v1543, %v1535
        %v1608 = vpack.c.b16 %v1544, %v1536
        %v1609 = vpack.c.b16 %v1545, %v1537
        %v1610 = vpack.c.b16 %v1546, %v1538
        %v1611 = vpack.c.b16 %v1547, %v1539
        %v1612 = vpack.c.b16 %v1548, %v1540
        %v1613 = vpack.c.b16 %v1549, %v1541
        %1678 = vmatprep.subr.bf16.mxu0 %v1607
        %1679 = vmatpush1.bf16.msra.mxu0 %v1606
        %1680 = vmatprep.subr.bf16.mxu0 %v1599
        %1681 = vmatpush1.bf16.msra.mxu0 %v1598
        %1682 = vmatprep.subr.bf16.mxu0 %v1591
        %1683 = vmatpush1.bf16.msra.mxu0 %v1590
        %1684 = vmatprep.subr.bf16.mxu0 %v1583
        %1685 = vmatpush1.bf16.msra.mxu0 %v1582
        %1686 = vmatprep.subr.bf16.mxu0 %v1575
        %1687 = vmatpush1.bf16.msra.mxu0 %v1574
        %1688 = vmatprep.subr.bf16.mxu0 %v1567
        %1689 = vmatpush1.bf16.msra.mxu0 %v1566
        %1690 = vmatprep.subr.bf16.mxu0 %v1559
        %1691 = vmatpush1.bf16.msra.mxu0 %v1558
        %1692 = vmatprep.subr.bf16.mxu0 %v1551
        %1693 = vmatpush1.bf16.msra.mxu0 %v1550
        %1694 = vmatprep.subr.bf16.mxu0 0
        %1695 = vmatpush2.bf16.msra.mxu0 0
        %1696 = vmatprep.subr.bf16.mxu0 0
        %1697 = vmatpush2.bf16.msra.mxu0 0
        %1698 = vmatprep.subr.bf16.mxu0 0
        %1699 = vmatpush2.bf16.msra.mxu0 0
        %1700 = vmatprep.subr.bf16.mxu0 0
        %1701 = vmatpush2.bf16.msra.mxu0 0
        %1702 = vmatprep.subr.bf16.mxu0 0
        %1703 = vmatpush2.bf16.msra.mxu0 0
        %1704 = vmatprep.subr.bf16.mxu0 0
        %1705 = vmatpush2.bf16.msra.mxu0 0
        %1706 = vmatprep.subr.bf16.mxu0 0
        %1707 = vmatpush2.bf16.msra.mxu0 0
        %1708 = vmatprep.subr.bf16.mxu0 0
        %1709 = vmatpush2.bf16.msra.mxu0 0
        %1710 = vmatprep.mubr.bf16.mxu0 0
        %1711 = vmatmul.mubr.bf16.gmra.mxu0 %v1293
        %v1712 = vpop.f32.mrf.mxu0
        %v1713 = vadd.f32 0.0, %v1712
        %v1714 = vpop.f32.mrf.mxu0
        %v1715 = vadd.f32 0.0, %v1714
        %v1716 = vpop.f32.mrf.mxu0
        %v1717 = vpop.f32.mrf.mxu0
        %1718 = vdwg.mxu0
        %1719 = vmatprep.subr.bf16.mxu0 %v1609
        %1720 = vmatpush1.bf16.msra.mxu0 %v1608
        %1721 = vmatprep.subr.bf16.mxu0 %v1601
        %1722 = vmatpush1.bf16.msra.mxu0 %v1600
        %1723 = vmatprep.subr.bf16.mxu0 %v1593
        %1724 = vmatpush1.bf16.msra.mxu0 %v1592
        %1725 = vmatprep.subr.bf16.mxu0 %v1585
        %1726 = vmatpush1.bf16.msra.mxu0 %v1584
        %1727 = vmatprep.subr.bf16.mxu0 %v1577
        %1728 = vmatpush1.bf16.msra.mxu0 %v1576
        %1729 = vmatprep.subr.bf16.mxu0 %v1569
        %1730 = vmatpush1.bf16.msra.mxu0 %v1568
        %1731 = vmatprep.subr.bf16.mxu0 %v1561
        %1732 = vmatpush1.bf16.msra.mxu0 %v1560
        %1733 = vmatprep.subr.bf16.mxu0 %v1553
        %1734 = vmatpush1.bf16.msra.mxu0 %v1552
        %1735 = vmatprep.subr.bf16.mxu0 0
        %1736 = vmatpush2.bf16.msra.mxu0 0
        %1737 = vmatprep.subr.bf16.mxu0 0
        %1738 = vmatpush2.bf16.msra.mxu0 0
        %1739 = vmatprep.subr.bf16.mxu0 0
        %1740 = vmatpush2.bf16.msra.mxu0 0
        %1741 = vmatprep.subr.bf16.mxu0 0
        %1742 = vmatpush2.bf16.msra.mxu0 0
        %1743 = vmatprep.subr.bf16.mxu0 0
        %1744 = vmatpush2.bf16.msra.mxu0 0
        %1745 = vmatprep.subr.bf16.mxu0 0
        %1746 = vmatpush2.bf16.msra.mxu0 0
        %1747 = vmatprep.subr.bf16.mxu0 0
        %1748 = vmatpush2.bf16.msra.mxu0 0
        %1749 = vmatprep.subr.bf16.mxu0 0
        %1750 = vmatpush2.bf16.msra.mxu0 0
        %1751 = vmatprep.mubr.bf16.mxu0 0
        %1752 = vmatmul.mubr.bf16.gmra.mxu0 %v1293
        %v1753 = vpop.f32.mrf.mxu0
        %v1754 = vadd.f32 0.0, %v1753
        %v1755 = vpop.f32.mrf.mxu0
        %v1756 = vadd.f32 0.0, %v1755
        %v1757 = vpop.f32.mrf.mxu0
        %v1758 = vpop.f32.mrf.mxu0
        %1759 = vdwg.mxu0
        %1760 = vmatprep.subr.bf16.mxu0 %v1611
        %1761 = vmatpush1.bf16.msra.mxu0 %v1610
        %1762 = vmatprep.subr.bf16.mxu0 %v1603
        %1763 = vmatpush1.bf16.msra.mxu0 %v1602
        %1764 = vmatprep.subr.bf16.mxu0 %v1595
        %1765 = vmatpush1.bf16.msra.mxu0 %v1594
        %1766 = vmatprep.subr.bf16.mxu0 %v1587
        %1767 = vmatpush1.bf16.msra.mxu0 %v1586
        %1768 = vmatprep.subr.bf16.mxu0 %v1579
        %1769 = vmatpush1.bf16.msra.mxu0 %v1578
        %1770 = vmatprep.subr.bf16.mxu0 %v1571
        %1771 = vmatpush1.bf16.msra.mxu0 %v1570
        %1772 = vmatprep.subr.bf16.mxu0 %v1563
        %1773 = vmatpush1.bf16.msra.mxu0 %v1562
        %1774 = vmatprep.subr.bf16.mxu0 %v1555
        %1775 = vmatpush1.bf16.msra.mxu0 %v1554
        %1776 = vmatprep.subr.bf16.mxu0 0
        %1777 = vmatpush2.bf16.msra.mxu0 0
        %1778 = vmatprep.subr.bf16.mxu0 0
        %1779 = vmatpush2.bf16.msra.mxu0 0
        %1780 = vmatprep.subr.bf16.mxu0 0
        %1781 = vmatpush2.bf16.msra.mxu0 0
        %1782 = vmatprep.subr.bf16.mxu0 0
        %1783 = vmatpush2.bf16.msra.mxu0 0
        %1784 = vmatprep.subr.bf16.mxu0 0
        %1785 = vmatpush2.bf16.msra.mxu0 0
        %1786 = vmatprep.subr.bf16.mxu0 0
        %1787 = vmatpush2.bf16.msra.mxu0 0
        %1788 = vmatprep.subr.bf16.mxu0 0
        %1789 = vmatpush2.bf16.msra.mxu0 0
        %1790 = vmatprep.subr.bf16.mxu0 0
        %1791 = vmatpush2.bf16.msra.mxu0 0
        %1792 = vmatprep.mubr.bf16.mxu0 0
        %1793 = vmatmul.mubr.bf16.gmra.mxu0 %v1293
        %v1794 = vpop.f32.mrf.mxu0
        %v1795 = vadd.f32 0.0, %v1794
        %v1796 = vpop.f32.mrf.mxu0
        %v1797 = vadd.f32 0.0, %v1796
        %v1798 = vpop.f32.mrf.mxu0
        %v1799 = vpop.f32.mrf.mxu0
        %1800 = vdwg.mxu0
        %1801 = vmatprep.subr.bf16.mxu0 %v1613
        %1802 = vmatpush1.bf16.msra.mxu0 %v1612
        %1803 = vmatprep.subr.bf16.mxu0 %v1605
        %1804 = vmatpush1.bf16.msra.mxu0 %v1604
        %1805 = vmatprep.subr.bf16.mxu0 %v1597
        %1806 = vmatpush1.bf16.msra.mxu0 %v1596
        %1807 = vmatprep.subr.bf16.mxu0 %v1589
        %1808 = vmatpush1.bf16.msra.mxu0 %v1588
        %1809 = vmatprep.subr.bf16.mxu0 %v1581
        %1810 = vmatpush1.bf16.msra.mxu0 %v1580
        %1811 = vmatprep.subr.bf16.mxu0 %v1573
        %1812 = vmatpush1.bf16.msra.mxu0 %v1572
        %1813 = vmatprep.subr.bf16.mxu0 %v1565
        %1814 = vmatpush1.bf16.msra.mxu0 %v1564
        %1815 = vmatprep.subr.bf16.mxu0 %v1557
        %1816 = vmatpush1.bf16.msra.mxu0 %v1556
        %1817 = vmatprep.subr.bf16.mxu0 0
        %1818 = vmatpush2.bf16.msra.mxu0 0
        %1819 = vmatprep.subr.bf16.mxu0 0
        %1820 = vmatpush2.bf16.msra.mxu0 0
        %1821 = vmatprep.subr.bf16.mxu0 0
        %1822 = vmatpush2.bf16.msra.mxu0 0
        %1823 = vmatprep.subr.bf16.mxu0 0
        %1824 = vmatpush2.bf16.msra.mxu0 0
        %1825 = vmatprep.subr.bf16.mxu0 0
        %1826 = vmatpush2.bf16.msra.mxu0 0
        %1827 = vmatprep.subr.bf16.mxu0 0
        %1828 = vmatpush2.bf16.msra.mxu0 0
        %1829 = vmatprep.subr.bf16.mxu0 0
        %1830 = vmatpush2.bf16.msra.mxu0 0
        %1831 = vmatprep.subr.bf16.mxu0 0
        %1832 = vmatpush2.bf16.msra.mxu0 0
        %1833 = vmatprep.mubr.bf16.mxu0 0
        %1834 = vmatmul.mubr.bf16.gmra.mxu0 %v1293
        %v1835 = vpop.f32.mrf.mxu0
        %v1836 = vadd.f32 0.0, %v1835
        %v1837 = vpop.f32.mrf.mxu0
        %v1838 = vadd.f32 0.0, %v1837
        %v1839 = vpop.f32.mrf.mxu0
        %v1840 = vpop.f32.mrf.mxu0
        %1841 = vdwg.mxu0
        %v1842 = vsub.f32 0.0, %v1713
        %v1843 = vsub.f32 0.0, %v1715
        %v1844 = vsub.f32 0.0, %v1754
        %v1845 = vsub.f32 0.0, %v1756
        %v1846 = vmul.f32 %v1842, 1.442695
        %v1847 = vpow.pop %v1846
        %v1848 = vmul.f32 %v1843, 1.442695
        %v1849 = vpow.pop %v1848
        %v1850 = vmul.f32 %v1844, 1.442695
        %v1851 = vpow.pop %v1850
        %v1852 = vmul.f32 %v1845, 1.442695
        %v1853 = vpow.pop %v1852
        %v1854 = vadd.f32 %v1847, 1.0
        %v1855 = vadd.f32 %v1849, 1.0
        %v1856 = vadd.f32 %v1851, 1.0
        %v1857 = vadd.f32 %v1853, 1.0
        %v1858 = vrcp.pop %v1854
        %v1859 = vrcp.pop %v1855
        %v1860 = vrcp.pop %v1856
        %v1861 = vrcp.pop %v1857
        %v1862 = vmul.f32 %v1713, %v1858
        %v1863 = vmul.f32 %v1715, %v1859
        %v1864 = vmul.f32 %v1754, %v1860
        %v1865 = vmul.f32 %v1756, %v1861
        %v1866 = vmul.f32 %v1862, %v1795
        %v1867 = vmul.f32 %v1863, %v1797
        %v1868 = vmul.f32 %v1864, %v1836
        %v1869 = vmul.f32 %v1865, %v1838
        %v1870 = vpack.c.bf16 %v1866, %v1866
        %v1871 = vpack.c.bf16 %v1867, %v1867
        %v1872 = vpack.c.bf16 %v1868, %v1868
        %v1873 = vpack.c.bf16 %v1869, %v1869
        %v1874 = vld [vmem:[%s367] sm:$0xf]
        %v1875 = vld [vmem:[%s367 + $0x4] sm:$0xf]
        %v1876 = vld [vmem:[%s367 + $0x8] sm:$0xf]
        %v1877 = vld [vmem:[%s367 + $0xc] sm:$0xf]
        %v1878 = vld [vmem:[%s367 + $0x10] sm:$0xf]
        %v1879 = vld [vmem:[%s367 + $0x14] sm:$0xf]
        %v1880 = vld [vmem:[%s367 + $0x18] sm:$0xf]
        %v1881 = vld [vmem:[%s367 + $0x1c] sm:$0xf]
        %v1882 = vld [vmem:[%s367 + $0x20] sm:$0xf]
        %v1883 = vld [vmem:[%s367 + $0x24] sm:$0xf]
        %v1884 = vld [vmem:[%s367 + $0x28] sm:$0xf]
        %v1885 = vld [vmem:[%s367 + $0x2c] sm:$0xf]
        %v1886 = vld [vmem:[%s367 + $0x30] sm:$0xf]
        %v1887 = vld [vmem:[%s367 + $0x34] sm:$0xf]
        %v1888 = vld [vmem:[%s367 + $0x38] sm:$0xf]
        %v1889 = vld [vmem:[%s367 + $0x3c] sm:$0xf]
        %v1890 = vld [vmem:[%s367 + $0x40] sm:$0xf]
        %v1891 = vld [vmem:[%s367 + $0x44] sm:$0xf]
        %v1892 = vld [vmem:[%s367 + $0x48] sm:$0xf]
        %v1893 = vld [vmem:[%s367 + $0x4c] sm:$0xf]
        %v1894 = vld [vmem:[%s367 + $0x50] sm:$0xf]
        %v1895 = vld [vmem:[%s367 + $0x54] sm:$0xf]
        %v1896 = vld [vmem:[%s367 + $0x58] sm:$0xf]
        %v1897 = vld [vmem:[%s367 + $0x5c] sm:$0xf]
        %v1898 = vld [vmem:[%s367 + $0x60] sm:$0xf]
        %v1899 = vld [vmem:[%s367 + $0x64] sm:$0xf]
        %v1900 = vld [vmem:[%s367 + $0x68] sm:$0xf]
        %v1901 = vld [vmem:[%s367 + $0x6c] sm:$0xf]
        %v1902 = vld [vmem:[%s367 + $0x70] sm:$0xf]
        %v1903 = vld [vmem:[%s367 + $0x74] sm:$0xf]
        %v1904 = vld [vmem:[%s367 + $0x78] sm:$0xf]
        %v1905 = vld [vmem:[%s367 + $0x7c] sm:$0xf]
        %v1906 = vld [vmem:[%s367 + $0x80] sm:$0xf]
        %v1907 = vld [vmem:[%s367 + $0x84] sm:$0xf]
        %v1908 = vld [vmem:[%s367 + $0x88] sm:$0xf]
        %v1909 = vld [vmem:[%s367 + $0x8c] sm:$0xf]
        %v1910 = vld [vmem:[%s367 + $0x90] sm:$0xf]
        %v1911 = vld [vmem:[%s367 + $0x94] sm:$0xf]
        %v1912 = vld [vmem:[%s367 + $0x98] sm:$0xf]
        %v1913 = vld [vmem:[%s367 + $0x9c] sm:$0xf]
        %v1914 = vld [vmem:[%s367 + $0xa0] sm:$0xf]
        %v1915 = vld [vmem:[%s367 + $0xa4] sm:$0xf]
        %v1916 = vld [vmem:[%s367 + $0xa8] sm:$0xf]
        %v1917 = vld [vmem:[%s367 + $0xac] sm:$0xf]
        %v1918 = vld [vmem:[%s367 + $0xb0] sm:$0xf]
        %v1919 = vld [vmem:[%s367 + $0xb4] sm:$0xf]
        %v1920 = vld [vmem:[%s367 + $0xb8] sm:$0xf]
        %v1921 = vld [vmem:[%s367 + $0xbc] sm:$0xf]
        %v1922 = vld [vmem:[%s367 + $0xc0] sm:$0xf]
        %v1923 = vld [vmem:[%s367 + $0xc4] sm:$0xf]
        %v1924 = vld [vmem:[%s367 + $0xc8] sm:$0xf]
        %v1925 = vld [vmem:[%s367 + $0xcc] sm:$0xf]
        %v1926 = vld [vmem:[%s367 + $0xd0] sm:$0xf]
        %v1927 = vld [vmem:[%s367 + $0xd4] sm:$0xf]
        %v1928 = vld [vmem:[%s367 + $0xd8] sm:$0xf]
        %v1929 = vld [vmem:[%s367 + $0xdc] sm:$0xf]
        %v1930 = vld [vmem:[%s367 + $0xe0] sm:$0xf]
        %v1931 = vld [vmem:[%s367 + $0xe4] sm:$0xf]
        %v1932 = vld [vmem:[%s367 + $0xe8] sm:$0xf]
        %v1933 = vld [vmem:[%s367 + $0xec] sm:$0xf]
        %v1934 = vld [vmem:[%s367 + $0xf0] sm:$0xf]
        %v1935 = vld [vmem:[%s367 + $0xf4] sm:$0xf]
        %v1936 = vld [vmem:[%s367 + $0xf8] sm:$0xf]
        %v1937 = vld [vmem:[%s367 + $0xfc] sm:$0xf]
        %v2002 = vunpack.c.l.b16 %v1874
        %v2003 = vunpack.c.l.b16 %v1875
        %v2004 = vunpack.c.l.b16 %v1876
        %v2005 = vunpack.c.l.b16 %v1877
        %v2006 = vunpack.c.l.b16 %v1878
        %v2007 = vunpack.c.l.b16 %v1879
        %v2008 = vunpack.c.l.b16 %v1880
        %v2009 = vunpack.c.l.b16 %v1881
        %v2010 = vunpack.c.l.b16 %v1882
        %v2011 = vunpack.c.l.b16 %v1883
        %v2012 = vunpack.c.l.b16 %v1884
        %v2013 = vunpack.c.l.b16 %v1885
        %v2014 = vunpack.c.l.b16 %v1886
        %v2015 = vunpack.c.l.b16 %v1887
        %v2016 = vunpack.c.l.b16 %v1888
        %v2017 = vunpack.c.l.b16 %v1889
        %v2018 = vunpack.c.l.b16 %v1890
        %v2019 = vunpack.c.l.b16 %v1891
        %v2020 = vunpack.c.l.b16 %v1892
        %v2021 = vunpack.c.l.b16 %v1893
        %v2022 = vunpack.c.l.b16 %v1894
        %v2023 = vunpack.c.l.b16 %v1895
        %v2024 = vunpack.c.l.b16 %v1896
        %v2025 = vunpack.c.l.b16 %v1897
        %v2026 = vunpack.c.l.b16 %v1898
        %v2027 = vunpack.c.l.b16 %v1899
        %v2028 = vunpack.c.l.b16 %v1900
        %v2029 = vunpack.c.l.b16 %v1901
        %v2030 = vunpack.c.l.b16 %v1902
        %v2031 = vunpack.c.l.b16 %v1903
        %v2032 = vunpack.c.l.b16 %v1904
        %v2033 = vunpack.c.l.b16 %v1905
        %v2034 = vunpack.c.l.b16 %v1906
        %v2035 = vunpack.c.l.b16 %v1907
        %v2036 = vunpack.c.l.b16 %v1908
        %v2037 = vunpack.c.l.b16 %v1909
        %v2038 = vunpack.c.l.b16 %v1910
        %v2039 = vunpack.c.l.b16 %v1911
        %v2040 = vunpack.c.l.b16 %v1912
        %v2041 = vunpack.c.l.b16 %v1913
        %v2042 = vunpack.c.l.b16 %v1914
        %v2043 = vunpack.c.l.b16 %v1915
        %v2044 = vunpack.c.l.b16 %v1916
        %v2045 = vunpack.c.l.b16 %v1917
        %v2046 = vunpack.c.l.b16 %v1918
        %v2047 = vunpack.c.l.b16 %v1919
        %v2048 = vunpack.c.l.b16 %v1920
        %v2049 = vunpack.c.l.b16 %v1921
        %v2050 = vunpack.c.l.b16 %v1922
        %v2051 = vunpack.c.l.b16 %v1923
        %v2052 = vunpack.c.l.b16 %v1924
        %v2053 = vunpack.c.l.b16 %v1925
        %v2054 = vunpack.c.l.b16 %v1926
        %v2055 = vunpack.c.l.b16 %v1927
        %v2056 = vunpack.c.l.b16 %v1928
        %v2057 = vunpack.c.l.b16 %v1929
        %v2058 = vunpack.c.l.b16 %v1930
        %v2059 = vunpack.c.l.b16 %v1931
        %v2060 = vunpack.c.l.b16 %v1932
        %v2061 = vunpack.c.l.b16 %v1933
        %v2062 = vunpack.c.l.b16 %v1934
        %v2063 = vunpack.c.l.b16 %v1935
        %v2064 = vunpack.c.l.b16 %v1936
        %v2065 = vunpack.c.l.b16 %v1937
        %v2066 = vpack.c.b16 %v2003, %v2002
        %v2067 = vpack.c.b16 %v2005, %v2004
        %v2068 = vpack.c.b16 %v2007, %v2006
        %v2069 = vpack.c.b16 %v2009, %v2008
        %v2070 = vpack.c.b16 %v2011, %v2010
        %v2071 = vpack.c.b16 %v2013, %v2012
        %v2072 = vpack.c.b16 %v2015, %v2014
        %v2073 = vpack.c.b16 %v2017, %v2016
        %v2074 = vpack.c.b16 %v2019, %v2018
        %v2075 = vpack.c.b16 %v2021, %v2020
        %v2076 = vpack.c.b16 %v2023, %v2022
        %v2077 = vpack.c.b16 %v2025, %v2024
        %v2078 = vpack.c.b16 %v2027, %v2026
        %v2079 = vpack.c.b16 %v2029, %v2028
        %v2080 = vpack.c.b16 %v2031, %v2030
        %v2081 = vpack.c.b16 %v2033, %v2032
        %v2082 = vpack.c.b16 %v2035, %v2034
        %v2083 = vpack.c.b16 %v2037, %v2036
        %v2084 = vpack.c.b16 %v2039, %v2038
        %v2085 = vpack.c.b16 %v2041, %v2040
        %v2086 = vpack.c.b16 %v2043, %v2042
        %v2087 = vpack.c.b16 %v2045, %v2044
        %v2088 = vpack.c.b16 %v2047, %v2046
        %v2089 = vpack.c.b16 %v2049, %v2048
        %v2090 = vpack.c.b16 %v2051, %v2050
        %v2091 = vpack.c.b16 %v2053, %v2052
        %v2092 = vpack.c.b16 %v2055, %v2054
        %v2093 = vpack.c.b16 %v2057, %v2056
        %v2094 = vpack.c.b16 %v2059, %v2058
        %v2095 = vpack.c.b16 %v2061, %v2060
        %v2096 = vpack.c.b16 %v2063, %v2062
        %v2097 = vpack.c.b16 %v2065, %v2064
        %2130 = vmatprep.subr.bf16.mxu0 0
        %2131 = vmatpush1.bf16.msra.mxu0 %v2073
        %2132 = vmatprep.subr.bf16.mxu0 0
        %2133 = vmatpush1.bf16.msra.mxu0 %v2072
        %2134 = vmatprep.subr.bf16.mxu0 0
        %2135 = vmatpush1.bf16.msra.mxu0 %v2071
        %2136 = vmatprep.subr.bf16.mxu0 0
        %2137 = vmatpush1.bf16.msra.mxu0 %v2070
        %2138 = vmatprep.subr.bf16.mxu0 0
        %2139 = vmatpush1.bf16.msra.mxu0 %v2069
        %2140 = vmatprep.subr.bf16.mxu0 0
        %2141 = vmatpush1.bf16.msra.mxu0 %v2068
        %2142 = vmatprep.subr.bf16.mxu0 0
        %2143 = vmatpush1.bf16.msra.mxu0 %v2067
        %2144 = vmatprep.subr.bf16.mxu0 0
        %2145 = vmatpush1.bf16.msra.mxu0 %v2066
        %2146 = vmatprep.subr.bf16.mxu0 0
        %2147 = vmatpush2.bf16.msra.mxu0 %v2081
        %2148 = vmatprep.subr.bf16.mxu0 0
        %2149 = vmatpush2.bf16.msra.mxu0 %v2080
        %2150 = vmatprep.subr.bf16.mxu0 0
        %2151 = vmatpush2.bf16.msra.mxu0 %v2079
        %2152 = vmatprep.subr.bf16.mxu0 0
        %2153 = vmatpush2.bf16.msra.mxu0 %v2078
        %2154 = vmatprep.subr.bf16.mxu0 0
        %2155 = vmatpush2.bf16.msra.mxu0 %v2077
        %2156 = vmatprep.subr.bf16.mxu0 0
        %2157 = vmatpush2.bf16.msra.mxu0 %v2076
        %2158 = vmatprep.subr.bf16.mxu0 0
        %2159 = vmatpush2.bf16.msra.mxu0 %v2075
        %2160 = vmatprep.subr.bf16.mxu0 0
        %2161 = vmatpush2.bf16.msra.mxu0 %v2074
        %2162 = vmatprep.mubr.bf16.mxu0 %v1871
        %2163 = vmatmul.mubr.bf16.gmra.mxu0 %v1870
        %v2164 = vpop.f32.mrf.mxu0
        %v2165 = vadd.f32 0.0, %v2164
        %v2166 = vpop.f32.mrf.mxu0
        %v2167 = vpop.f32.mrf.mxu0
        %v2168 = vpop.f32.mrf.mxu0
        %2169 = vdwg.mxu0
        %2170 = vmatprep.subr.bf16.mxu0 0
        %2171 = vmatpush1.bf16.msra.mxu0 %v2089
        %2172 = vmatprep.subr.bf16.mxu0 0
        %2173 = vmatpush1.bf16.msra.mxu0 %v2088
        %2174 = vmatprep.subr.bf16.mxu0 0
        %2175 = vmatpush1.bf16.msra.mxu0 %v2087
        %2176 = vmatprep.subr.bf16.mxu0 0
        %2177 = vmatpush1.bf16.msra.mxu0 %v2086
        %2178 = vmatprep.subr.bf16.mxu0 0
        %2179 = vmatpush1.bf16.msra.mxu0 %v2085
        %2180 = vmatprep.subr.bf16.mxu0 0
        %2181 = vmatpush1.bf16.msra.mxu0 %v2084
        %2182 = vmatprep.subr.bf16.mxu0 0
        %2183 = vmatpush1.bf16.msra.mxu0 %v2083
        %2184 = vmatprep.subr.bf16.mxu0 0
        %2185 = vmatpush1.bf16.msra.mxu0 %v2082
        %2186 = vmatprep.subr.bf16.mxu0 0
        %2187 = vmatpush2.bf16.msra.mxu0 %v2097
        %2188 = vmatprep.subr.bf16.mxu0 0
        %2189 = vmatpush2.bf16.msra.mxu0 %v2096
        %2190 = vmatprep.subr.bf16.mxu0 0
        %2191 = vmatpush2.bf16.msra.mxu0 %v2095
        %2192 = vmatprep.subr.bf16.mxu0 0
        %2193 = vmatpush2.bf16.msra.mxu0 %v2094
        %2194 = vmatprep.subr.bf16.mxu0 0
        %2195 = vmatpush2.bf16.msra.mxu0 %v2093
        %2196 = vmatprep.subr.bf16.mxu0 0
        %2197 = vmatpush2.bf16.msra.mxu0 %v2092
        %2198 = vmatprep.subr.bf16.mxu0 0
        %2199 = vmatpush2.bf16.msra.mxu0 %v2091
        %2200 = vmatprep.subr.bf16.mxu0 0
        %2201 = vmatpush2.bf16.msra.mxu0 %v2090
        %2202 = vmatprep.mubr.bf16.mxu0 %v1873
        %2203 = vmatmul.mubr.bf16.gmra.mxu0 %v1872
        %v2204 = vpop.f32.mrf.mxu0
        %v2205 = vadd.f32 %v2165, %v2204
        %v2206 = vpop.f32.mrf.mxu0
        %v2207 = vpop.f32.mrf.mxu0
        %v2208 = vpop.f32.mrf.mxu0
        %2209 = vdwg.mxu0
        %v2210 = vadd.f32 %v1279, %v2205
        %2211 = vst [vmem:[#allocation2] sm:$0x3] %v2210
        %p2212 = scmp.eq.s32.totalorder %s29, 1
        // Predicated region
        $region65: #{decode_step.1} parent=51 // pred_check
          %p2213 = pneg %p2212
        $region66: #{decode_step.1} parent=51 // pred_check_branch
          %2215 = sbr.rel (%p2213) target = $region68
        $region67: #{decode_step.1} parent=51 // pred_region
          %v2216 = vmul.f32 %v2210, %v2210
          %v2217 = vsel %vm460, %v2216, 0.0
          %2218 = vadd.xlane.f32.xlu0 %v2217
          %v2219 = vpop.xlane.xlu0 %2218
          %v2220 = vmul.f32 %v2219, %v464
          %v2221 = vadd.f32 %v2220, 1e-05
          %v2222 = vrsqrt.pop %v2221
          %v2223 = vmul.f32 %v2210, %v2222
          %v2224 = vlaneseq
          %v2225 = vshrl.u32 %v2224, 7
          %v2226 = vsub.s32 0, %v2225
          %v2227 = vrot.slane %v440, %v2226
          %v2228 = vmul.f32 %v2223, %v2227
          %v2229 = vpack.c.bf16 %v2228, %v2228
          %v2230 = vld [vmem:[%s8] sm:$0xff]
          %v2231 = vld [vmem:[%s8 + $0x8] sm:$0xff]
          %v2232 = vld [vmem:[%s8 + $0x10] sm:$0xff]
          %v2233 = vld [vmem:[%s8 + $0x18] sm:$0xff]
          %v2234 = vld [vmem:[%s8 + $0x20] sm:$0xff]
          %v2235 = vld [vmem:[%s8 + $0x28] sm:$0xff]
          %v2236 = vld [vmem:[%s8 + $0x30] sm:$0xff]
          %v2237 = vld [vmem:[%s8 + $0x38] sm:$0xff]
          %v2238 = vld [vmem:[%s8 + $0x40] sm:$0xff]
          %v2239 = vld [vmem:[%s8 + $0x48] sm:$0xff]
          %v2240 = vld [vmem:[%s8 + $0x50] sm:$0xff]
          %v2241 = vld [vmem:[%s8 + $0x58] sm:$0xff]
          %v2242 = vld [vmem:[%s8 + $0x60] sm:$0xff]
          %v2243 = vld [vmem:[%s8 + $0x68] sm:$0xff]
          %v2244 = vld [vmem:[%s8 + $0x70] sm:$0xff]
          %v2245 = vld [vmem:[%s8 + $0x78] sm:$0xff]
          %v2262 = vunpack.c.l.b16 %v2230
          %v2263 = vunpack.c.h.b16 %v2230
          %v2264 = vunpack.c.l.b16 %v2231
          %v2265 = vunpack.c.h.b16 %v2231
          %v2266 = vunpack.c.l.b16 %v2232
          %v2267 = vunpack.c.h.b16 %v2232
          %v2268 = vunpack.c.l.b16 %v2233
          %v2269 = vunpack.c.h.b16 %v2233
          %v2270 = vunpack.c.l.b16 %v2234
          %v2271 = vunpack.c.h.b16 %v2234
          %v2272 = vunpack.c.l.b16 %v2235
          %v2273 = vunpack.c.h.b16 %v2235
          %v2274 = vunpack.c.l.b16 %v2236
          %v2275 = vunpack.c.h.b16 %v2236
          %v2276 = vunpack.c.l.b16 %v2237
          %v2277 = vunpack.c.h.b16 %v2237
          %v2278 = vunpack.c.l.b16 %v2238
          %v2279 = vunpack.c.h.b16 %v2238
          %v2280 = vunpack.c.l.b16 %v2239
          %v2281 = vunpack.c.h.b16 %v2239
          %v2282 = vunpack.c.l.b16 %v2240
          %v2283 = vunpack.c.h.b16 %v2240
          %v2284 = vunpack.c.l.b16 %v2241
          %v2285 = vunpack.c.h.b16 %v2241
          %v2286 = vunpack.c.l.b16 %v2242
          %v2287 = vunpack.c.h.b16 %v2242
          %v2288 = vunpack.c.l.b16 %v2243
          %v2289 = vunpack.c.h.b16 %v2243
          %v2290 = vunpack.c.l.b16 %v2244
          %v2291 = vunpack.c.h.b16 %v2244
          %v2292 = vunpack.c.l.b16 %v2245
          %v2293 = vunpack.c.h.b16 %v2245
          %v2294 = vpack.c.b16 %v2264, %v2262
          %v2295 = vpack.c.b16 %v2265, %v2263
          %v2296 = vpack.c.b16 %v2268, %v2266
          %v2297 = vpack.c.b16 %v2269, %v2267
          %v2298 = vpack.c.b16 %v2272, %v2270
          %v2299 = vpack.c.b16 %v2273, %v2271
          %v2300 = vpack.c.b16 %v2276, %v2274
          %v2301 = vpack.c.b16 %v2277, %v2275
          %v2302 = vpack.c.b16 %v2280, %v2278
          %v2303 = vpack.c.b16 %v2281, %v2279
          %v2304 = vpack.c.b16 %v2284, %v2282
          %v2305 = vpack.c.b16 %v2285, %v2283
          %v2306 = vpack.c.b16 %v2288, %v2286
          %v2307 = vpack.c.b16 %v2289, %v2287
          %v2308 = vpack.c.b16 %v2292, %v2290
          %v2309 = vpack.c.b16 %v2293, %v2291
          %2326 = vmatprep.subr.bf16.mxu0 %v2309
          %2327 = vmatpush1.bf16.msra.mxu0 %v2308
          %2328 = vmatprep.subr.bf16.mxu0 %v2307
          %2329 = vmatpush1.bf16.msra.mxu0 %v2306
          %2330 = vmatprep.subr.bf16.mxu0 %v2305
          %2331 = vmatpush1.bf16.msra.mxu0 %v2304
          %2332 = vmatprep.subr.bf16.mxu0 %v2303
          %2333 = vmatpush1.bf16.msra.mxu0 %v2302
          %2334 = vmatprep.subr.bf16.mxu0 %v2301
          %2335 = vmatpush1.bf16.msra.mxu0 %v2300
          %2336 = vmatprep.subr.bf16.mxu0 %v2299
          %2337 = vmatpush1.bf16.msra.mxu0 %v2298
          %2338 = vmatprep.subr.bf16.mxu0 %v2297
          %2339 = vmatpush1.bf16.msra.mxu0 %v2296
          %2340 = vmatprep.subr.bf16.mxu0 %v2295
          %2341 = vmatpush1.bf16.msra.mxu0 %v2294
          %2342 = vmatprep.subr.bf16.mxu0 0
          %2343 = vmatpush2.bf16.msra.mxu0 0
          %2344 = vmatprep.subr.bf16.mxu0 0
          %2345 = vmatpush2.bf16.msra.mxu0 0
          %2346 = vmatprep.subr.bf16.mxu0 0
          %2347 = vmatpush2.bf16.msra.mxu0 0
          %2348 = vmatprep.subr.bf16.mxu0 0
          %2349 = vmatpush2.bf16.msra.mxu0 0
          %2350 = vmatprep.subr.bf16.mxu0 0
          %2351 = vmatpush2.bf16.msra.mxu0 0
          %2352 = vmatprep.subr.bf16.mxu0 0
          %2353 = vmatpush2.bf16.msra.mxu0 0
          %2354 = vmatprep.subr.bf16.mxu0 0
          %2355 = vmatpush2.bf16.msra.mxu0 0
          %2356 = vmatprep.subr.bf16.mxu0 0
          %2357 = vmatpush2.bf16.msra.mxu0 0
          %2358 = vmatprep.mubr.bf16.mxu0 0
          %2359 = vmatmul.mubr.bf16.gmra.mxu0 %v2229
          %v2360 = vpop.f32.mrf.mxu0
          %v2361 = vadd.f32 0.0, %v2360
          %v2362 = vpop.f32.mrf.mxu0
          %v2363 = vadd.f32 0.0, %v2362
          %v2364 = vpop.f32.mrf.mxu0
          %v2365 = vpop.f32.mrf.mxu0
          %2366 = vdwg.mxu0
          %v2369 = vcombine.low %v2361, %v2363
          %v2371 = vunpack.c.l.s4 1983009808
          %v2372 = vunpack.c.0.s8 %v2371
          %v2373 = vlaneseq
          %v2374 = vshrl.u32 %v2373, 7
          %v2375 = vsub.s32 %v2372, %v2374
          %v2376 = vrot.slane %v2369, %v2375
          %2378 = vst [vmem:[%s9] sm:$0xf] %v2376
        $region68: #{decode_step.1} parent=51 // pred_fallthru
          _
        %p2379 = scmp.lt.s32.totalorder %s29, 1
        %s2380 = scalar_select %p2379, %s29, 1
        %s2381 = smul.addr %s2380, 2
        %s2382 = scalar_lea.vmem %s10, %s2381
        // Predicated region
        $region69: #{decode_step.1} parent=51 // pred_check
          %p2383 = pneg %p230
        $region70: #{decode_step.1} parent=51 // pred_check_branch
          %2385 = sbr.rel (%p2383) target = $region72
        $region71: #{decode_step.1} parent=51 // pred_region
          _
        $region72: #{decode_step.1} parent=51 // pred_fallthru
          _
        // Predicated region
        $region73: #{decode_step.1} parent=51 // pred_check
          %p2386 = pneg %p256
        $region74: #{decode_step.1} parent=51 // pred_check_branch
          %2388 = sbr.rel (%p2386) target = $region76
        $region75: #{decode_step.1} parent=51 // pred_region
          _
        $region76: #{decode_step.1} parent=51 // pred_fallthru
          _
        // Predicated region
        $region77: #{decode_step.1} parent=51 // pred_check
          %p2389 = pneg %p230
        $region78: #{decode_step.1} parent=51 // pred_check_branch
          %2391 = sbr.rel (%p2389) target = $region80
        $region79: #{decode_step.1} parent=51 // pred_region
          _
        $region80: #{decode_step.1} parent=51 // pred_fallthru
          _
      $region52: #{decode_step.1} parent=5 // pred_fallthru
        _
      %p2392 = scmp.le.s32.totalorder 2, %s24
      // Predicated region
      $region81: #{decode_step.1} parent=5 // pred_check
        %p2393 = pneg %p2392
      $region82: #{decode_step.1} parent=5 // pred_check_branch
        %2395 = sbr.rel (%p2393) target = $region84
      $region83: #{decode_step.1} parent=5 // pred_region
        %s2396 = ssub.s32 %s24, 2
        // Predicated region
        $region85: #{decode_step.1} parent=83 // pred_check
          %p2397 = pneg %p262
        $region86: #{decode_step.1} parent=83 // pred_check_branch
          %2399 = sbr.rel (%p2397) target = $region88
        $region87: #{decode_step.1} parent=83 // pred_region
          %p2400 = scmp.lt.s32.totalorder %s30, 1
          %s2401 = scalar_select %p2400, %s30, 1
          %s2402 = smul.addr %s2401, 2
          %s2403 = scalar_lea.vmem %s10, %s2402
        $region88: #{decode_step.1} parent=83 // pred_fallthru
          _
      $region84: #{decode_step.1} parent=5 // pred_fallthru
        _
    $region6: #{decode_step.1} parent=1 // loop_footer
      %s28 = sadd.s32 1, %s24
    $region7: #{decode_step.1} parent=1 // loop_footer_branch
      %23 = sbr.rel target = $region3
    $region8: #{decode_step.1} parent=1 // loop_exit
      _
    %2404 = vsyncpa [#allocation6], 1
    %s2405 = scalar_lea.sflag [#allocation6], 1
    %2406 = vsyncpa %s2405, 1
    %2407 = vsyncpa [#allocation8], 1
    %s2408 = scalar_lea.sflag [#allocation8], 1
    %2409 = vsyncpa %s2408, 1

</llo_original>
